<compile_context>
chip_gen: v7x
topology: tpu7x:2x2x1
jax: 0.10.0
libtpu: 0.0.40
codegen_flags: <defaults>
</compile_context>

<pallas_src>
import functools

import numpy as np
import jax
import jax.numpy as jnp
from jax import lax
from jax.experimental import pallas as pl
from jax.experimental.pallas import tpu as pltpu


# ---------------------------------------------------------------------------
# Fused kernel (one grid step per image).
# Layout: activations are 2-D, lane index = w*C + c (channels fastest).
# ---------------------------------------------------------------------------
def _vpad(v, p):
    """Zero-pad `p` rows on top/bottom of a 2-D value via a 0/1 matmul.

    Keeps the padded plane in registers (no scratch zero-fill / round trip);
    the 0/1 matrix is built from 2-D iota and costs one tiny MXU op.
    """
    rows = v.shape[0]
    r = lax.broadcasted_iota(jnp.int32, (rows + 2 * p, rows), 0)
    h = lax.broadcasted_iota(jnp.int32, (rows + 2 * p, rows), 1)
    m = (r == h + p).astype(jnp.float32)
    return jnp.dot(m, v, preferred_element_type=jnp.float32)


def _fused_kernel(x_ref, mlo_ref, lop_ref, colm_ref, rowm_ref, wll_ref,
                  mlh_ref, wh_ref, bsyn_ref, pw_ref, pb_ref, o_ref,
                  *, H, W, C, K):
    f32 = jnp.float32
    Ho = H // 2
    pad = K // 2

    # ---- local_op: depthwise KxK (+BN+ReLU) + depthwise 1x1 (+BN) ----------
    # Horizontal tap shifts + per-channel weights are folded into mlo[ky],
    # so the conv is K matmuls over row-shifted copies (MXU, no per-tap
    # sublane relayouts).
    x = x_ref[0].astype(f32)                                  # (H, W*C)
    xv = _vpad(x, pad)                                        # (H+2p, W*C)
    acc = jnp.dot(xv[0:H, :], mlo_ref[0], preferred_element_type=f32)
    for ky in range(1, K):
        acc = acc + jnp.dot(xv[ky:ky + H, :], mlo_ref[ky],
                            preferred_element_type=f32)
    lop = lop_ref[...]                                        # (3, W*C)
    y = jnp.maximum(acc + lop[0:1, :], 0.0) * lop[1:2, :] + lop[2:3, :]

    # ---- Haar (db1) analysis: LL and first high band via two small matmuls.
    yc = jnp.dot(y, colm_ref[...], preferred_element_type=f32)    # (H, Wo*C)
    llh = jnp.dot(rowm_ref[...], yc, preferred_element_type=f32)  # (H, Wo*C)
    ll = llh[0:Ho, :]
    lh = llh[Ho:2 * Ho, :]

    # ---- LL branch: dw3x3 + 1x1 pointwise + inverse-DWT combine, all folded
    # into wll[ky] (32, 128); biases folded into bsyn.
    llv = _vpad(ll, 1)
    phases = jnp.dot(llv[0:Ho, :], wll_ref[0], preferred_element_type=f32)
    for ky in range(1, 3):
        phases = phases + jnp.dot(llv[ky:ky + Ho, :], wll_ref[ky],
                                  preferred_element_type=f32)

    # ---- High-band branch: dw KxK (wavelet/base scales folded) ->
    # [SS2D identity] -> dense 3x3 conv C->3C + inverse-DWT combine (folded
    # into wh[ky]).
    lhv = _vpad(lh, pad)
    g = jnp.dot(lhv[0:Ho, :], mlh_ref[0], preferred_element_type=f32)
    for ky in range(1, K):
        g = g + jnp.dot(lhv[ky:ky + Ho, :], mlh_ref[ky],
                        preferred_element_type=f32)
    # TODO(synk): SS2D selective-scan global attention is not defined in the
    # provided spec; it is treated as identity here.
    gv = _vpad(g, 1)
    for ky in range(3):
        phases = phases + jnp.dot(gv[ky:ky + Ho, :], wh_ref[ky],
                                  preferred_element_type=f32)

    phases = phases + bsyn_ref[...]          # all branch biases, pre-folded

    # ---- proj: ReLU -> 1x1 conv (+BN); the phase->pixel interleave is folded
    # into pw, so this is one matmul and one full-width (8,128) store.
    out = jnp.dot(jnp.maximum(phases, 0.0), pw_ref[...],
                  preferred_element_type=f32) + pb_ref[...]
    o_ref[0] = out.astype(o_ref.dtype)


# ---------------------------------------------------------------------------
# Wrapper: NHWC in / NHWC out.  Only free (memory-order-preserving) reshapes.
# ---------------------------------------------------------------------------
def fiqamamba_block_window(x_nhwc, kp, *, K=5):
    B, H, W, C = x_nhwc.shape
    # TODO(synk): odd H/W would need MBWT's F.pad branch; not needed here.
    assert H % 2 == 0 and W % 2 == 0
    Ho = H // 2
    WC = W * C
    x_flat = x_nhwc.reshape(B, H, WC)            # free: same memory order

    out_flat = pl.pallas_call(
        functools.partial(_fused_kernel, H=H, W=W, C=C, K=K),
        out_shape=jax.ShapeDtypeStruct((B, Ho, 2 * WC), x_nhwc.dtype),
        grid_spec=pltpu.PrefetchScalarGridSpec(
            num_scalar_prefetch=0,
            grid=(B,),
            in_specs=[
                pl.BlockSpec((1, H, WC), lambda b: (b, 0, 0)),
                pl.BlockSpec(kp["mlo"].shape, lambda b: (0, 0, 0)),
                pl.BlockSpec(kp["lop"].shape, lambda b: (0, 0)),
                pl.BlockSpec(kp["colm"].shape, lambda b: (0, 0)),
                pl.BlockSpec(kp["rowm"].shape, lambda b: (0, 0)),
                pl.BlockSpec(kp["wll"].shape, lambda b: (0, 0, 0)),
                pl.BlockSpec(kp["mlh"].shape, lambda b: (0, 0, 0)),
                pl.BlockSpec(kp["wh"].shape, lambda b: (0, 0, 0)),
                pl.BlockSpec(kp["bsyn"].shape, lambda b: (0, 0)),
                pl.BlockSpec(kp["projw"].shape, lambda b: (0, 0)),
                pl.BlockSpec(kp["projb"].shape, lambda b: (0, 0)),
            ],
            out_specs=pl.BlockSpec((1, Ho, 2 * WC), lambda b: (b, 0, 0)),
        ),
        compiler_params=pltpu.CompilerParams(dimension_semantics=("parallel",)),
    )(x_flat, kp["mlo"], kp["lop"], kp["colm"], kp["rowm"], kp["wll"],
      kp["mlh"], kp["wh"], kp["bsyn"], kp["projw"], kp["projb"])

    return out_flat.reshape(B, H, W, C)          # free: same memory order


# ---------------------------------------------------------------------------
# Synthetic module-level parameters (BN / scale modules folded), same
# convention as the PyTorch module after Conv+BN fusion.
# ---------------------------------------------------------------------------
def init_params(key, C, *, K=5):
    ks = jax.random.split(key, 20)

    def nrm(i, shape, s):
        return jax.random.normal(ks[i], shape, jnp.float32) * s

    # local_op: dwKxK (no bias) + BN1 + ReLU + dw1x1(groups=C, no bias) + BN2
    s1 = 1.0 + nrm(0, (C,), 0.1)
    b1 = nrm(1, (C,), 0.1)
    s2 = 1.0 + nrm(2, (C,), 0.1)
    b2 = nrm(3, (C,), 0.1)
    w_dw = nrm(4, (K * K, C), 0.3)
    alpha = 1.0 + nrm(5, (C,), 0.2)            # 1x1 depthwise == per-channel scale

    # MBWT (wt_levels=1, db1)
    ll_dw_w = nrm(6, (9, C), 0.3)
    ll_dw_b = nrm(7, (C,), 0.1)
    ll_pw_w = nrm(8, (C, C), 0.4)
    ll_pw_b = nrm(9, (C,), 0.1)
    lh_dw_w = nrm(10, (K * K, C), 0.3)         # wavelet_convs, ::3 channel subset
    wscale = 0.1 * (1.0 + nrm(11, (C,), 0.1))  # wavelet_scale (init 0.1)
    bscale = 1.0 + nrm(12, (C,), 0.1)          # base_scale
    h_conv_w = nrm(13, (3, 9, C, C), 0.3)      # band-major dense 3x3, C -> 3C
    h_conv_b = nrm(14, (3, C), 0.1)

    # proj: 1x1 conv (no bias) + BN
    proj_w = nrm(15, (C, C), 0.4)
    s3 = 1.0 + nrm(16, (C,), 0.1)
    b3 = nrm(17, (C,), 0.1)

    return dict(
        lo_w=w_dw * s1[None, :],               # BN1 scale folded into the dw taps
        lo_b1=b1,
        lo_s2=alpha * s2,                      # dw1x1 scale folded with BN2 scale
        lo_b2=b2,
        ll_dw_w=ll_dw_w, ll_dw_b=ll_dw_b,
        ll_pw_w=ll_pw_w, ll_pw_b=ll_pw_b,
        lh_dw_w=lh_dw_w * (wscale * bscale)[None, :],  # scales folded (SS2D identity)
        h_conv_w=h_conv_w, h_conv_b=h_conv_b,
        proj_w=proj_w * s3[None, :],           # BN scale folded into 1x1 columns
        proj_b=b3,
    )


# ---------------------------------------------------------------------------
# Pack module-level params into kernel-ready, lane-packed / pre-folded arrays.
# Runs once on the host (numpy), outside jit.
# ---------------------------------------------------------------------------
def pack_params(p, *, H, W, C, K):
    Ho, Wo = H // 2, W // 2
    WC, WoC = W * C, Wo * C
    f64 = np.float64

    lo_w = np.asarray(p["lo_w"], f64)
    lo_b1 = np.asarray(p["lo_b1"], f64)
    lo_s2 = np.asarray(p["lo_s2"], f64)
    lo_b2 = np.asarray(p["lo_b2"], f64)
    ll_dw_w = np.asarray(p["ll_dw_w"], f64)
    ll_dw_b = np.asarray(p["ll_dw_b"], f64)
    ll_pw_w = np.asarray(p["ll_pw_w"], f64)
    ll_pw_b = np.asarray(p["ll_pw_b"], f64)
    lh_dw_w = np.asarray(p["lh_dw_w"], f64)
    h_conv_w = np.asarray(p["h_conv_w"], f64)
    h_conv_b = np.asarray(p["h_conv_b"], f64)
    proj_w = np.asarray(p["proj_w"], f64)
    proj_b = np.asarray(p["proj_b"], f64)

    def dw_shift_mats(w, k, npix):
        # Fold the horizontal tap shift + per-channel depthwise weight into one
        # (npix*C, npix*C) matrix per vertical offset ky.
        m = np.zeros((k, npix * C, npix * C), f64)
        for ky in range(k):
            for wo in range(npix):
                for kx in range(k):
                    wi = wo + kx - k // 2
                    if 0 <= wi < npix:
                        for c in range(C):
                            m[ky, wi * C + c, wo * C + c] = w[ky * k + kx, c]
        return m

    mlo = dw_shift_mats(lo_w, K, W)                    # (K, WC, WC)
    mll = dw_shift_mats(ll_dw_w, 3, Wo)                # (3, WoC, WoC)
    mlh = dw_shift_mats(lh_dw_w, K, Wo)                # (K, WoC, WoC)

    lop = np.stack([np.tile(lo_b1, W), np.tile(lo_s2, W), np.tile(lo_b2, W)])

    # Haar analysis: column-pair sum (right matmul) and signed row-pair
    # combine (left matmul) -> rows 0..Ho-1 = LL, rows Ho..2Ho-1 = first high band.
    colm = np.zeros((WC, WoC), f64)
    for w_ in range(W):
        for c in range(C):
            colm[w_ * C + c, (w_ // 2) * C + c] = 1.0
    rowm = np.zeros((H, H), f64)
    for ho in range(Ho):
        rowm[ho, 2 * ho] = 0.5
        rowm[ho, 2 * ho + 1] = 0.5
        rowm[Ho + ho, 2 * ho] = 0.5
        rowm[Ho + ho, 2 * ho + 1] = -0.5

    # Inverse Haar DWT (conv_transpose2d, stride 2): phase signs per band.
    S = np.array([[1, 1, 1, 1],
                  [1, 1, -1, -1],
                  [1, -1, 1, -1],
                  [1, -1, -1, 1]], f64)
    msyn = 0.5 * np.kron(S, np.eye(WoC))               # (4*WoC, 4*WoC)
    msyn_top, msyn_bot = msyn[:WoC], msyn[WoC:]

    # LL branch: dw3x3 shift -> block-diagonal 1x1 pointwise -> synthesis.
    pw_block = np.kron(np.eye(Wo), ll_pw_w)            # (WoC, WoC)
    wll = np.stack([mll[ky] @ pw_block @ msyn_top for ky in range(3)])

    # High-band dense 3x3 conv C->3C folded with the synthesis combine.
    mh = np.zeros((3, WoC, 3 * WoC), f64)
    for ky in range(3):
        for wo in range(Wo):
            for kx in range(3):
                wi = wo + kx - 1
                if 0 <= wi < Wo:
                    for band in range(3):
                        mh[ky, wi * C:(wi + 1) * C,
                           band * WoC + wo * C: band * WoC + (wo + 1) * C] = \
                            h_conv_w[band, ky * 3 + kx]
    wh = np.stack([mh[ky] @ msyn_bot for ky in range(3)])

    # All branch biases folded through the synthesis into one lane vector.
    b_h_lane = np.concatenate([np.tile(h_conv_b[b], Wo) for b in range(3)])
    bsyn = ((np.tile(ll_dw_b, Wo) @ pw_block + np.tile(ll_pw_b, Wo)) @ msyn_top
            + b_h_lane @ msyn_bot)

    # proj 1x1 (+BN) with the phase->output-pixel interleave folded in.
    projw = np.zeros((4 * WoC, 2 * WC), f64)
    for ph in range(4):
        i, j = ph // 2, ph % 2
        for wo in range(Wo):
            r0 = ph * WoC + wo * C
            c0 = i * WC + (2 * wo + j) * C
            projw[r0:r0 + C, c0:c0 + C] = proj_w
    projb = np.tile(proj_b, 2 * W)

    f32 = jnp.float32
    return dict(
        mlo=jnp.asarray(mlo, f32), lop=jnp.asarray(lop, f32),
        colm=jnp.asarray(colm, f32), rowm=jnp.asarray(rowm, f32),
        wll=jnp.asarray(wll, f32), mlh=jnp.asarray(mlh, f32),
        wh=jnp.asarray(wh, f32),
        bsyn=jnp.asarray(bsyn.reshape(1, -1), f32),
        projw=jnp.asarray(projw, f32),
        projb=jnp.asarray(projb.reshape(1, -1), f32),
    )


# ---------------------------------------------------------------------------
# Pure-JAX reference (same math, no Pallas, no weight folding across stages)
# for a numerical self-check.
# ---------------------------------------------------------------------------
def _dw_taps(x, w, k):
    B, H, W, C = x.shape
    pad = k // 2
    xp = jnp.pad(x, ((0, 0), (pad, pad), (pad, pad), (0, 0)))
    acc = jnp.zeros((B, H, W, C), jnp.float32)
    for t in range(k * k):
        ky, kx = divmod(t, k)
        acc = acc + xp[:, ky:ky + H, kx:kx + W, :] * w[t]
    return acc


def forward_ref(x, p, *, K=5):
    hi = lax.Precision.HIGHEST
    B, H, W, C = x.shape
    Ho, Wo = H // 2, W // 2
    y = jnp.maximum(_dw_taps(x, p["lo_w"], K) + p["lo_b1"], 0.0) * p["lo_s2"] + p["lo_b2"]
    yr = y.reshape(B, Ho, 2, Wo, 2, C)
    p00, p01 = yr[:, :, 0, :, 0, :], yr[:, :, 0, :, 1, :]
    p10, p11 = yr[:, :, 1, :, 0, :], yr[:, :, 1, :, 1, :]
    ll = 0.5 * (p00 + p01 + p10 + p11)
    lh = 0.5 * (p00 + p01 - p10 - p11)
    x_ll = _dw_taps(ll, p["ll_dw_w"], 3) + p["ll_dw_b"]
    x_ll = jnp.einsum("bhwc,cd->bhwd", x_ll, p["ll_pw_w"], precision=hi) + p["ll_pw_b"]
    g = _dw_taps(lh, p["lh_dw_w"], K)
    gp = jnp.pad(g, ((0, 0), (1, 1), (1, 1), (0, 0)))
    bands = []
    for band in range(3):
        ab = jnp.zeros((B, Ho, Wo, C), jnp.float32)
        for t in range(9):
            ky, kx = divmod(t, 3)
            ab = ab + jnp.einsum("bhwc,cd->bhwd",
                                 gp[:, ky:ky + Ho, kx:kx + Wo, :],
                                 p["h_conv_w"][band, t], precision=hi)
        bands.append(ab + p["h_conv_b"][band])
    bh1, bh2, bh3 = bands
    o00 = 0.5 * (x_ll + bh1 + bh2 + bh3)
    o01 = 0.5 * (x_ll + bh1 - bh2 - bh3)
    o10 = 0.5 * (x_ll - bh1 + bh2 - bh3)
    o11 = 0.5 * (x_ll - bh1 - bh2 + bh3)
    ph = jnp.stack([o00, o01, o10, o11], axis=1)
    out = (ph.reshape(B, 2, 2, Ho, Wo, C)
             .transpose(0, 3, 1, 4, 2, 5)
             .reshape(B, H, W, C))
    out = jnp.maximum(out, 0.0)
    return jnp.einsum("bhwc,cd->bhwd", out, p["proj_w"], precision=hi) + p["proj_b"]


if __name__ == "__main__":
    key = jax.random.PRNGKey(0)
    B, C, H, W = 2, 4, 16, 16
    K = 5

    kx_, kp_ = jax.random.split(key)
    # PyTorch-style NCHW input, converted ONCE to NHWC (channels packed onto
    # lanes with W); the fused Pallas kernel then runs with no hot-path
    # transposes and only free reshapes in the wrapper.
    x_nchw = jax.random.normal(kx_, (B, C, H, W), jnp.float32)
    x = jnp.transpose(x_nchw, (0, 2, 3, 1))
    params = init_params(kp_, C, K=K)
    kparams = pack_params(params, H=H, W=W, C=C, K=K)

    fwd = jax.jit(lambda t: fiqamamba_block_window(t, kparams, K=K))
    y = fwd(x)
    jax.block_until_ready(y)

    y_ref = forward_ref(x, params, K=K)
    assert y.shape == (B, H, W, C), y.shape
    assert bool(jnp.all(jnp.isfinite(y)))
    err = float(jnp.max(jnp.abs(y - y_ref)))
    # Tolerance allows for MXU pass-rounding differences between the kernel's
    # pre-folded matmul chain and the reference's sequential ops; a real
    # logic/indexing bug would produce O(1) errors.
    assert err < 5e-2, f"max abs err vs reference: {err}"
    print("KERNEL_OK")
</pallas_src>

<mosaic_0001>
module attributes {stable_mosaic.version = 11 : i64} {
  func.func @_fused_kernel(%arg0: i32, %arg1: memref<1x16x64xf32, #tpu.memory_space<vmem>>, %arg2: memref<5x64x64xf32, #tpu.memory_space<vmem>>, %arg3: memref<3x64xf32, #tpu.memory_space<vmem>>, %arg4: memref<64x32xf32, #tpu.memory_space<vmem>>, %arg5: memref<16x16xf32, #tpu.memory_space<vmem>>, %arg6: memref<3x32x128xf32, #tpu.memory_space<vmem>>, %arg7: memref<5x32x32xf32, #tpu.memory_space<vmem>>, %arg8: memref<3x32x128xf32, #tpu.memory_space<vmem>>, %arg9: memref<1x128xf32, #tpu.memory_space<vmem>>, %arg10: memref<128x128xf32, #tpu.memory_space<vmem>>, %arg11: memref<1x128xf32, #tpu.memory_space<vmem>>, %arg12: memref<1x8x128xf32, #tpu.memory_space<vmem>>) attributes {dimension_semantics = [#tpu.dimension_semantics<parallel>], iteration_bounds = array<i64: 2>, scalar_prefetch = 0 : i64, scratch_operands = 0 : i64, tpu.core_type = #tpu.core_type<tc>, window_params = [{transform_indices = @transform_0, window_bounds = array<i64: 1, 16, 64>}, {pipeline_mode = #tpu.pipeline_mode<synchronous>, transform_indices = @transform_1, window_bounds = array<i64: 5, 64, 64>}, {pipeline_mode = #tpu.pipeline_mode<synchronous>, transform_indices = @transform_2, window_bounds = array<i64: 3, 64>}, {pipeline_mode = #tpu.pipeline_mode<synchronous>, transform_indices = @transform_3, window_bounds = array<i64: 64, 32>}, {pipeline_mode = #tpu.pipeline_mode<synchronous>, transform_indices = @transform_4, window_bounds = array<i64: 16, 16>}, {pipeline_mode = #tpu.pipeline_mode<synchronous>, transform_indices = @transform_5, window_bounds = array<i64: 3, 32, 128>}, {pipeline_mode = #tpu.pipeline_mode<synchronous>, transform_indices = @transform_6, window_bounds = array<i64: 5, 32, 32>}, {pipeline_mode = #tpu.pipeline_mode<synchronous>, transform_indices = @transform_7, window_bounds = array<i64: 3, 32, 128>}, {pipeline_mode = #tpu.pipeline_mode<synchronous>, transform_indices = @transform_8, window_bounds = array<i64: 1, 128>}, {pipeline_mode = #tpu.pipeline_mode<synchronous>, transform_indices = @transform_9, window_bounds = array<i64: 128, 128>}, {pipeline_mode = #tpu.pipeline_mode<synchronous>, transform_indices = @transform_10, window_bounds = array<i64: 1, 128>}, {transform_indices = @transform_11, window_bounds = array<i64: 1, 8, 128>}]} {
    %c0 = arith.constant 0 : index
    %c0_0 = arith.constant 0 : index
    %c0_1 = arith.constant 0 : index
    %0 = vector.load %arg1[%c0, %c0_0, %c0_1] : memref<1x16x64xf32, #tpu.memory_space<vmem>>, vector<1x16x64xf32>
    %1 = vector.shape_cast %0 : vector<1x16x64xf32> to vector<16x64xf32>
    %2 = tpu.iota {dimensions = array<i32: 0>} : vector<20x16xi32>
    %3 = tpu.iota {dimensions = array<i32: 1>} : vector<20x16xi32>
    %c2_i32 = arith.constant 2 : i32
    %4 = vector.broadcast %c2_i32 : i32 to vector<20x16xi32>
    %5 = arith.addi %3, %4 : vector<20x16xi32>
    %6 = arith.cmpi eq, %2, %5 : vector<20x16xi32>
    %7 = arith.extui %6 : vector<20x16xi1> to vector<20x16xi32>
    %8 = arith.sitofp %7 : vector<20x16xi32> to vector<20x16xf32>
    %cst = arith.constant dense<0.000000e+00> : vector<20x64xf32>
    %9 = tpu.matmul %8, %1, %cst {dimension_numbers = #tpu.dot_dimension_numbers<[1], [0], [0], [1], [0, 0, 1, 1], [], []>} : vector<20x16xf32>, vector<16x64xf32>, vector<20x64xf32> -> vector<20x64xf32>
    %10 = vector.extract_strided_slice %9 {offsets = [0, 0], sizes = [16, 64], strides = [1, 1]} : vector<20x64xf32> to vector<16x64xf32>
    %c0_2 = arith.constant 0 : index
    %c0_3 = arith.constant 0 : index
    %c0_4 = arith.constant 0 : index
    %11 = vector.load %arg2[%c0_2, %c0_3, %c0_4] : memref<5x64x64xf32, #tpu.memory_space<vmem>>, vector<1x64x64xf32>
    %12 = vector.shape_cast %11 : vector<1x64x64xf32> to vector<64x64xf32>
    %cst_5 = arith.constant dense<0.000000e+00> : vector<16x64xf32>
    %13 = tpu.matmul %10, %12, %cst_5 {dimension_numbers = #tpu.dot_dimension_numbers<[1], [0], [0], [1], [0, 0, 1, 1], [], []>} : vector<16x64xf32>, vector<64x64xf32>, vector<16x64xf32> -> vector<16x64xf32>
    %14 = vector.extract_strided_slice %9 {offsets = [1, 0], sizes = [16, 64], strides = [1, 1]} : vector<20x64xf32> to vector<16x64xf32>
    %c1 = arith.constant 1 : index
    %c0_6 = arith.constant 0 : index
    %c0_7 = arith.constant 0 : index
    %15 = vector.load %arg2[%c1, %c0_6, %c0_7] : memref<5x64x64xf32, #tpu.memory_space<vmem>>, vector<1x64x64xf32>
    %16 = vector.shape_cast %15 : vector<1x64x64xf32> to vector<64x64xf32>
    %cst_8 = arith.constant dense<0.000000e+00> : vector<16x64xf32>
    %17 = tpu.matmul %14, %16, %cst_8 {dimension_numbers = #tpu.dot_dimension_numbers<[1], [0], [0], [1], [0, 0, 1, 1], [], []>} : vector<16x64xf32>, vector<64x64xf32>, vector<16x64xf32> -> vector<16x64xf32>
    %18 = arith.addf %13, %17 : vector<16x64xf32>
    %19 = vector.extract_strided_slice %9 {offsets = [2, 0], sizes = [16, 64], strides = [1, 1]} : vector<20x64xf32> to vector<16x64xf32>
    %c2 = arith.constant 2 : index
    %c0_9 = arith.constant 0 : index
    %c0_10 = arith.constant 0 : index
    %20 = vector.load %arg2[%c2, %c0_9, %c0_10] : memref<5x64x64xf32, #tpu.memory_space<vmem>>, vector<1x64x64xf32>
    %21 = vector.shape_cast %20 : vector<1x64x64xf32> to vector<64x64xf32>
    %cst_11 = arith.constant dense<0.000000e+00> : vector<16x64xf32>
    %22 = tpu.matmul %19, %21, %cst_11 {dimension_numbers = #tpu.dot_dimension_numbers<[1], [0], [0], [1], [0, 0, 1, 1], [], []>} : vector<16x64xf32>, vector<64x64xf32>, vector<16x64xf32> -> vector<16x64xf32>
    %23 = arith.addf %18, %22 : vector<16x64xf32>
    %24 = vector.extract_strided_slice %9 {offsets = [3, 0], sizes = [16, 64], strides = [1, 1]} : vector<20x64xf32> to vector<16x64xf32>
    %c3 = arith.constant 3 : index
    %c0_12 = arith.constant 0 : index
    %c0_13 = arith.constant 0 : index
    %25 = vector.load %arg2[%c3, %c0_12, %c0_13] : memref<5x64x64xf32, #tpu.memory_space<vmem>>, vector<1x64x64xf32>
    %26 = vector.shape_cast %25 : vector<1x64x64xf32> to vector<64x64xf32>
    %cst_14 = arith.constant dense<0.000000e+00> : vector<16x64xf32>
    %27 = tpu.matmul %24, %26, %cst_14 {dimension_numbers = #tpu.dot_dimension_numbers<[1], [0], [0], [1], [0, 0, 1, 1], [], []>} : vector<16x64xf32>, vector<64x64xf32>, vector<16x64xf32> -> vector<16x64xf32>
    %28 = arith.addf %23, %27 : vector<16x64xf32>
    %29 = vector.extract_strided_slice %9 {offsets = [4, 0], sizes = [16, 64], strides = [1, 1]} : vector<20x64xf32> to vector<16x64xf32>
    %c4 = arith.constant 4 : index
    %c0_15 = arith.constant 0 : index
    %c0_16 = arith.constant 0 : index
    %30 = vector.load %arg2[%c4, %c0_15, %c0_16] : memref<5x64x64xf32, #tpu.memory_space<vmem>>, vector<1x64x64xf32>
    %31 = vector.shape_cast %30 : vector<1x64x64xf32> to vector<64x64xf32>
    %cst_17 = arith.constant dense<0.000000e+00> : vector<16x64xf32>
    %32 = tpu.matmul %29, %31, %cst_17 {dimension_numbers = #tpu.dot_dimension_numbers<[1], [0], [0], [1], [0, 0, 1, 1], [], []>} : vector<16x64xf32>, vector<64x64xf32>, vector<16x64xf32> -> vector<16x64xf32>
    %33 = arith.addf %28, %32 : vector<16x64xf32>
    %c0_18 = arith.constant 0 : index
    %c0_19 = arith.constant 0 : index
    %34 = vector.load %arg3[%c0_18, %c0_19] : memref<3x64xf32, #tpu.memory_space<vmem>>, vector<3x64xf32>
    %35 = vector.extract_strided_slice %34 {offsets = [0, 0], sizes = [1, 64], strides = [1, 1]} : vector<3x64xf32> to vector<1x64xf32>
    %36 = vector.broadcast %35 : vector<1x64xf32> to vector<16x64xf32>
    %37 = arith.addf %33, %36 : vector<16x64xf32>
    %cst_20 = arith.constant 0.000000e+00 : f32
    %38 = vector.broadcast %cst_20 : f32 to vector<16x64xf32>
    %39 = arith.maximumf %37, %38 : vector<16x64xf32>
    %40 = vector.extract_strided_slice %34 {offsets = [1, 0], sizes = [1, 64], strides = [1, 1]} : vector<3x64xf32> to vector<1x64xf32>
    %41 = vector.broadcast %40 : vector<1x64xf32> to vector<16x64xf32>
    %42 = arith.mulf %39, %41 : vector<16x64xf32>
    %43 = vector.extract_strided_slice %34 {offsets = [2, 0], sizes = [1, 64], strides = [1, 1]} : vector<3x64xf32> to vector<1x64xf32>
    %44 = vector.broadcast %43 : vector<1x64xf32> to vector<16x64xf32>
    %45 = arith.addf %42, %44 : vector<16x64xf32>
    %c0_21 = arith.constant 0 : index
    %c0_22 = arith.constant 0 : index
    %46 = vector.load %arg4[%c0_21, %c0_22] : memref<64x32xf32, #tpu.memory_space<vmem>>, vector<64x32xf32>
    %cst_23 = arith.constant dense<0.000000e+00> : vector<16x32xf32>
    %47 = tpu.matmul %45, %46, %cst_23 {dimension_numbers = #tpu.dot_dimension_numbers<[1], [0], [0], [1], [0, 0, 1, 1], [], []>} : vector<16x64xf32>, vector<64x32xf32>, vector<16x32xf32> -> vector<16x32xf32>
    %c0_24 = arith.constant 0 : index
    %c0_25 = arith.constant 0 : index
    %48 = vector.load %arg5[%c0_24, %c0_25] : memref<16x16xf32, #tpu.memory_space<vmem>>, vector<16x16xf32>
    %cst_26 = arith.constant dense<0.000000e+00> : vector<16x32xf32>
    %49 = tpu.matmul %48, %47, %cst_26 {dimension_numbers = #tpu.dot_dimension_numbers<[1], [0], [0], [1], [0, 0, 1, 1], [], []>} : vector<16x16xf32>, vector<16x32xf32>, vector<16x32xf32> -> vector<16x32xf32>
    %50 = vector.extract_strided_slice %49 {offsets = [0, 0], sizes = [8, 32], strides = [1, 1]} : vector<16x32xf32> to vector<8x32xf32>
    %51 = vector.extract_strided_slice %49 {offsets = [8, 0], sizes = [8, 32], strides = [1, 1]} : vector<16x32xf32> to vector<8x32xf32>
    %52 = tpu.iota {dimensions = array<i32: 0>} : vector<10x8xi32>
    %53 = tpu.iota {dimensions = array<i32: 1>} : vector<10x8xi32>
    %c1_i32 = arith.constant 1 : i32
    %54 = vector.broadcast %c1_i32 : i32 to vector<10x8xi32>
    %55 = arith.addi %53, %54 : vector<10x8xi32>
    %56 = arith.cmpi eq, %52, %55 : vector<10x8xi32>
    %57 = arith.extui %56 : vector<10x8xi1> to vector<10x8xi32>
    %58 = arith.sitofp %57 : vector<10x8xi32> to vector<10x8xf32>
    %cst_27 = arith.constant dense<0.000000e+00> : vector<10x32xf32>
    %59 = tpu.matmul %58, %50, %cst_27 {dimension_numbers = #tpu.dot_dimension_numbers<[1], [0], [0], [1], [0, 0, 1, 1], [], []>} : vector<10x8xf32>, vector<8x32xf32>, vector<10x32xf32> -> vector<10x32xf32>
    %60 = vector.extract_strided_slice %59 {offsets = [0, 0], sizes = [8, 32], strides = [1, 1]} : vector<10x32xf32> to vector<8x32xf32>
    %c0_28 = arith.constant 0 : index
    %c0_29 = arith.constant 0 : index
    %c0_30 = arith.constant 0 : index
    %61 = vector.load %arg6[%c0_28, %c0_29, %c0_30] : memref<3x32x128xf32, #tpu.memory_space<vmem>>, vector<1x32x128xf32>
    %62 = vector.shape_cast %61 : vector<1x32x128xf32> to vector<32x128xf32>
    %cst_31 = arith.constant dense<0.000000e+00> : vector<8x128xf32>
    %63 = tpu.matmul %60, %62, %cst_31 {dimension_numbers = #tpu.dot_dimension_numbers<[1], [0], [0], [1], [0, 0, 1, 1], [], []>} : vector<8x32xf32>, vector<32x128xf32>, vector<8x128xf32> -> vector<8x128xf32>
    %64 = vector.extract_strided_slice %59 {offsets = [1, 0], sizes = [8, 32], strides = [1, 1]} : vector<10x32xf32> to vector<8x32xf32>
    %c1_32 = arith.constant 1 : index
    %c0_33 = arith.constant 0 : index
    %c0_34 = arith.constant 0 : index
    %65 = vector.load %arg6[%c1_32, %c0_33, %c0_34] : memref<3x32x128xf32, #tpu.memory_space<vmem>>, vector<1x32x128xf32>
    %66 = vector.shape_cast %65 : vector<1x32x128xf32> to vector<32x128xf32>
    %cst_35 = arith.constant dense<0.000000e+00> : vector<8x128xf32>
    %67 = tpu.matmul %64, %66, %cst_35 {dimension_numbers = #tpu.dot_dimension_numbers<[1], [0], [0], [1], [0, 0, 1, 1], [], []>} : vector<8x32xf32>, vector<32x128xf32>, vector<8x128xf32> -> vector<8x128xf32>
    %68 = arith.addf %63, %67 : vector<8x128xf32>
    %69 = vector.extract_strided_slice %59 {offsets = [2, 0], sizes = [8, 32], strides = [1, 1]} : vector<10x32xf32> to vector<8x32xf32>
    %c2_36 = arith.constant 2 : index
    %c0_37 = arith.constant 0 : index
    %c0_38 = arith.constant 0 : index
    %70 = vector.load %arg6[%c2_36, %c0_37, %c0_38] : memref<3x32x128xf32, #tpu.memory_space<vmem>>, vector<1x32x128xf32>
    %71 = vector.shape_cast %70 : vector<1x32x128xf32> to vector<32x128xf32>
    %cst_39 = arith.constant dense<0.000000e+00> : vector<8x128xf32>
    %72 = tpu.matmul %69, %71, %cst_39 {dimension_numbers = #tpu.dot_dimension_numbers<[1], [0], [0], [1], [0, 0, 1, 1], [], []>} : vector<8x32xf32>, vector<32x128xf32>, vector<8x128xf32> -> vector<8x128xf32>
    %73 = arith.addf %68, %72 : vector<8x128xf32>
    %74 = tpu.iota {dimensions = array<i32: 0>} : vector<12x8xi32>
    %75 = tpu.iota {dimensions = array<i32: 1>} : vector<12x8xi32>
    %c2_i32_40 = arith.constant 2 : i32
    %76 = vector.broadcast %c2_i32_40 : i32 to vector<12x8xi32>
    %77 = arith.addi %75, %76 : vector<12x8xi32>
    %78 = arith.cmpi eq, %74, %77 : vector<12x8xi32>
    %79 = arith.extui %78 : vector<12x8xi1> to vector<12x8xi32>
    %80 = arith.sitofp %79 : vector<12x8xi32> to vector<12x8xf32>
    %cst_41 = arith.constant dense<0.000000e+00> : vector<12x32xf32>
    %81 = tpu.matmul %80, %51, %cst_41 {dimension_numbers = #tpu.dot_dimension_numbers<[1], [0], [0], [1], [0, 0, 1, 1], [], []>} : vector<12x8xf32>, vector<8x32xf32>, vector<12x32xf32> -> vector<12x32xf32>
    %82 = vector.extract_strided_slice %81 {offsets = [0, 0], sizes = [8, 32], strides = [1, 1]} : vector<12x32xf32> to vector<8x32xf32>
    %c0_42 = arith.constant 0 : index
    %c0_43 = arith.constant 0 : index
    %c0_44 = arith.constant 0 : index
    %83 = vector.load %arg7[%c0_42, %c0_43, %c0_44] : memref<5x32x32xf32, #tpu.memory_space<vmem>>, vector<1x32x32xf32>
    %84 = vector.shape_cast %83 : vector<1x32x32xf32> to vector<32x32xf32>
    %cst_45 = arith.constant dense<0.000000e+00> : vector<8x32xf32>
    %85 = tpu.matmul %82, %84, %cst_45 {dimension_numbers = #tpu.dot_dimension_numbers<[1], [0], [0], [1], [0, 0, 1, 1], [], []>} : vector<8x32xf32>, vector<32x32xf32>, vector<8x32xf32> -> vector<8x32xf32>
    %86 = vector.extract_strided_slice %81 {offsets = [1, 0], sizes = [8, 32], strides = [1, 1]} : vector<12x32xf32> to vector<8x32xf32>
    %c1_46 = arith.constant 1 : index
    %c0_47 = arith.constant 0 : index
    %c0_48 = arith.constant 0 : index
    %87 = vector.load %arg7[%c1_46, %c0_47, %c0_48] : memref<5x32x32xf32, #tpu.memory_space<vmem>>, vector<1x32x32xf32>
    %88 = vector.shape_cast %87 : vector<1x32x32xf32> to vector<32x32xf32>
    %cst_49 = arith.constant dense<0.000000e+00> : vector<8x32xf32>
    %89 = tpu.matmul %86, %88, %cst_49 {dimension_numbers = #tpu.dot_dimension_numbers<[1], [0], [0], [1], [0, 0, 1, 1], [], []>} : vector<8x32xf32>, vector<32x32xf32>, vector<8x32xf32> -> vector<8x32xf32>
    %90 = arith.addf %85, %89 : vector<8x32xf32>
    %91 = vector.extract_strided_slice %81 {offsets = [2, 0], sizes = [8, 32], strides = [1, 1]} : vector<12x32xf32> to vector<8x32xf32>
    %c2_50 = arith.constant 2 : index
    %c0_51 = arith.constant 0 : index
    %c0_52 = arith.constant 0 : index
    %92 = vector.load %arg7[%c2_50, %c0_51, %c0_52] : memref<5x32x32xf32, #tpu.memory_space<vmem>>, vector<1x32x32xf32>
    %93 = vector.shape_cast %92 : vector<1x32x32xf32> to vector<32x32xf32>
    %cst_53 = arith.constant dense<0.000000e+00> : vector<8x32xf32>
    %94 = tpu.matmul %91, %93, %cst_53 {dimension_numbers = #tpu.dot_dimension_numbers<[1], [0], [0], [1], [0, 0, 1, 1], [], []>} : vector<8x32xf32>, vector<32x32xf32>, vector<8x32xf32> -> vector<8x32xf32>
    %95 = arith.addf %90, %94 : vector<8x32xf32>
    %96 = vector.extract_strided_slice %81 {offsets = [3, 0], sizes = [8, 32], strides = [1, 1]} : vector<12x32xf32> to vector<8x32xf32>
    %c3_54 = arith.constant 3 : index
    %c0_55 = arith.constant 0 : index
    %c0_56 = arith.constant 0 : index
    %97 = vector.load %arg7[%c3_54, %c0_55, %c0_56] : memref<5x32x32xf32, #tpu.memory_space<vmem>>, vector<1x32x32xf32>
    %98 = vector.shape_cast %97 : vector<1x32x32xf32> to vector<32x32xf32>
    %cst_57 = arith.constant dense<0.000000e+00> : vector<8x32xf32>
    %99 = tpu.matmul %96, %98, %cst_57 {dimension_numbers = #tpu.dot_dimension_numbers<[1], [0], [0], [1], [0, 0, 1, 1], [], []>} : vector<8x32xf32>, vector<32x32xf32>, vector<8x32xf32> -> vector<8x32xf32>
    %100 = arith.addf %95, %99 : vector<8x32xf32>
    %101 = vector.extract_strided_slice %81 {offsets = [4, 0], sizes = [8, 32], strides = [1, 1]} : vector<12x32xf32> to vector<8x32xf32>
    %c4_58 = arith.constant 4 : index
    %c0_59 = arith.constant 0 : index
    %c0_60 = arith.constant 0 : index
    %102 = vector.load %arg7[%c4_58, %c0_59, %c0_60] : memref<5x32x32xf32, #tpu.memory_space<vmem>>, vector<1x32x32xf32>
    %103 = vector.shape_cast %102 : vector<1x32x32xf32> to vector<32x32xf32>
    %cst_61 = arith.constant dense<0.000000e+00> : vector<8x32xf32>
    %104 = tpu.matmul %101, %103, %cst_61 {dimension_numbers = #tpu.dot_dimension_numbers<[1], [0], [0], [1], [0, 0, 1, 1], [], []>} : vector<8x32xf32>, vector<32x32xf32>, vector<8x32xf32> -> vector<8x32xf32>
    %105 = arith.addf %100, %104 : vector<8x32xf32>
    %106 = tpu.iota {dimensions = array<i32: 0>} : vector<10x8xi32>
    %107 = tpu.iota {dimensions = array<i32: 1>} : vector<10x8xi32>
    %c1_i32_62 = arith.constant 1 : i32
    %108 = vector.broadcast %c1_i32_62 : i32 to vector<10x8xi32>
    %109 = arith.addi %107, %108 : vector<10x8xi32>
    %110 = arith.cmpi eq, %106, %109 : vector<10x8xi32>
    %111 = arith.extui %110 : vector<10x8xi1> to vector<10x8xi32>
    %112 = arith.sitofp %111 : vector<10x8xi32> to vector<10x8xf32>
    %cst_63 = arith.constant dense<0.000000e+00> : vector<10x32xf32>
    %113 = tpu.matmul %112, %105, %cst_63 {dimension_numbers = #tpu.dot_dimension_numbers<[1], [0], [0], [1], [0, 0, 1, 1], [], []>} : vector<10x8xf32>, vector<8x32xf32>, vector<10x32xf32> -> vector<10x32xf32>
    %114 = vector.extract_strided_slice %113 {offsets = [0, 0], sizes = [8, 32], strides = [1, 1]} : vector<10x32xf32> to vector<8x32xf32>
    %c0_64 = arith.constant 0 : index
    %c0_65 = arith.constant 0 : index
    %c0_66 = arith.constant 0 : index
    %115 = vector.load %arg8[%c0_64, %c0_65, %c0_66] : memref<3x32x128xf32, #tpu.memory_space<vmem>>, vector<1x32x128xf32>
    %116 = vector.shape_cast %115 : vector<1x32x128xf32> to vector<32x128xf32>
    %cst_67 = arith.constant dense<0.000000e+00> : vector<8x128xf32>
    %117 = tpu.matmul %114, %116, %cst_67 {dimension_numbers = #tpu.dot_dimension_numbers<[1], [0], [0], [1], [0, 0, 1, 1], [], []>} : vector<8x32xf32>, vector<32x128xf32>, vector<8x128xf32> -> vector<8x128xf32>
    %118 = arith.addf %73, %117 : vector<8x128xf32>
    %119 = vector.extract_strided_slice %113 {offsets = [1, 0], sizes = [8, 32], strides = [1, 1]} : vector<10x32xf32> to vector<8x32xf32>
    %c1_68 = arith.constant 1 : index
    %c0_69 = arith.constant 0 : index
    %c0_70 = arith.constant 0 : index
    %120 = vector.load %arg8[%c1_68, %c0_69, %c0_70] : memref<3x32x128xf32, #tpu.memory_space<vmem>>, vector<1x32x128xf32>
    %121 = vector.shape_cast %120 : vector<1x32x128xf32> to vector<32x128xf32>
    %cst_71 = arith.constant dense<0.000000e+00> : vector<8x128xf32>
    %122 = tpu.matmul %119, %121, %cst_71 {dimension_numbers = #tpu.dot_dimension_numbers<[1], [0], [0], [1], [0, 0, 1, 1], [], []>} : vector<8x32xf32>, vector<32x128xf32>, vector<8x128xf32> -> vector<8x128xf32>
    %123 = arith.addf %118, %122 : vector<8x128xf32>
    %124 = vector.extract_strided_slice %113 {offsets = [2, 0], sizes = [8, 32], strides = [1, 1]} : vector<10x32xf32> to vector<8x32xf32>
    %c2_72 = arith.constant 2 : index
    %c0_73 = arith.constant 0 : index
    %c0_74 = arith.constant 0 : index
    %125 = vector.load %arg8[%c2_72, %c0_73, %c0_74] : memref<3x32x128xf32, #tpu.memory_space<vmem>>, vector<1x32x128xf32>
    %126 = vector.shape_cast %125 : vector<1x32x128xf32> to vector<32x128xf32>
    %cst_75 = arith.constant dense<0.000000e+00> : vector<8x128xf32>
    %127 = tpu.matmul %124, %126, %cst_75 {dimension_numbers = #tpu.dot_dimension_numbers<[1], [0], [0], [1], [0, 0, 1, 1], [], []>} : vector<8x32xf32>, vector<32x128xf32>, vector<8x128xf32> -> vector<8x128xf32>
    %128 = arith.addf %123, %127 : vector<8x128xf32>
    %c0_76 = arith.constant 0 : index
    %c0_77 = arith.constant 0 : index
    %129 = vector.load %arg9[%c0_76, %c0_77] : memref<1x128xf32, #tpu.memory_space<vmem>>, vector<1x128xf32>
    %130 = vector.broadcast %129 : vector<1x128xf32> to vector<8x128xf32>
    %131 = arith.addf %128, %130 : vector<8x128xf32>
    %cst_78 = arith.constant 0.000000e+00 : f32
    %132 = vector.broadcast %cst_78 : f32 to vector<8x128xf32>
    %133 = arith.maximumf %131, %132 : vector<8x128xf32>
    %c0_79 = arith.constant 0 : index
    %c0_80 = arith.constant 0 : index
    %134 = vector.load %arg10[%c0_79, %c0_80] : memref<128x128xf32, #tpu.memory_space<vmem>>, vector<128x128xf32>
    %cst_81 = arith.constant dense<0.000000e+00> : vector<8x128xf32>
    %135 = tpu.matmul %133, %134, %cst_81 {dimension_numbers = #tpu.dot_dimension_numbers<[1], [0], [0], [1], [0, 0, 1, 1], [], []>} : vector<8x128xf32>, vector<128x128xf32>, vector<8x128xf32> -> vector<8x128xf32>
    %c0_82 = arith.constant 0 : index
    %c0_83 = arith.constant 0 : index
    %136 = vector.load %arg11[%c0_82, %c0_83] : memref<1x128xf32, #tpu.memory_space<vmem>>, vector<1x128xf32>
    %137 = vector.broadcast %136 : vector<1x128xf32> to vector<8x128xf32>
    %138 = arith.addf %135, %137 : vector<8x128xf32>
    %c0_84 = arith.constant 0 : index
    %c0_85 = arith.constant 0 : index
    %c0_86 = arith.constant 0 : index
    %139 = vector.load %arg12[%c0_84, %c0_85, %c0_86] : memref<1x8x128xf32, #tpu.memory_space<vmem>>, vector<1x8x128xf32>
    %140 = vector.shape_cast %139 : vector<1x8x128xf32> to vector<8x128xf32>
    %141 = vector.shape_cast %138 : vector<8x128xf32> to vector<1x8x128xf32>
    tpu.vector_store %arg12[%c0_84, %c0_85, %c0_86], %141 {strides = array<i32>} : memref<1x8x128xf32, #tpu.memory_space<vmem>>, vector<1x8x128xf32>,
    return
  }
  func.func @transform_0(%arg0: i32) -> (i32, i32, i32) {
    %c0_i32 = arith.constant 0 : i32
    %c0_i32_0 = arith.constant 0 : i32
    %c0_i32_1 = arith.constant 0 : i32
    return %arg0, %c0_i32, %c0_i32_0 : i32, i32, i32
  }
  func.func @transform_1(%arg0: i32) -> (i32, i32, i32) {
    %c0_i32 = arith.constant 0 : i32
    %c0_i32_0 = arith.constant 0 : i32
    %c0_i32_1 = arith.constant 0 : i32
    %c0_i32_2 = arith.constant 0 : i32
    return %c0_i32, %c0_i32_0, %c0_i32_1 : i32, i32, i32
  }
  func.func @transform_2(%arg0: i32) -> (i32, i32) {
    %c0_i32 = arith.constant 0 : i32
    %c0_i32_0 = arith.constant 0 : i32
    %c0_i32_1 = arith.constant 0 : i32
    return %c0_i32, %c0_i32_0 : i32, i32
  }
  func.func @transform_3(%arg0: i32) -> (i32, i32) {
    %c0_i32 = arith.constant 0 : i32
    %c0_i32_0 = arith.constant 0 : i32
    %c0_i32_1 = arith.constant 0 : i32
    return %c0_i32, %c0_i32_0 : i32, i32
  }
  func.func @transform_4(%arg0: i32) -> (i32, i32) {
    %c0_i32 = arith.constant 0 : i32
    %c0_i32_0 = arith.constant 0 : i32
    %c0_i32_1 = arith.constant 0 : i32
    return %c0_i32, %c0_i32_0 : i32, i32
  }
  func.func @transform_5(%arg0: i32) -> (i32, i32, i32) {
    %c0_i32 = arith.constant 0 : i32
    %c0_i32_0 = arith.constant 0 : i32
    %c0_i32_1 = arith.constant 0 : i32
    %c0_i32_2 = arith.constant 0 : i32
    return %c0_i32, %c0_i32_0, %c0_i32_1 : i32, i32, i32
  }
  func.func @transform_6(%arg0: i32) -> (i32, i32, i32) {
    %c0_i32 = arith.constant 0 : i32
    %c0_i32_0 = arith.constant 0 : i32
    %c0_i32_1 = arith.constant 0 : i32
    %c0_i32_2 = arith.constant 0 : i32
    return %c0_i32, %c0_i32_0, %c0_i32_1 : i32, i32, i32
  }
  func.func @transform_7(%arg0: i32) -> (i32, i32, i32) {
    %c0_i32 = arith.constant 0 : i32
    %c0_i32_0 = arith.constant 0 : i32
    %c0_i32_1 = arith.constant 0 : i32
    %c0_i32_2 = arith.constant 0 : i32
    return %c0_i32, %c0_i32_0, %c0_i32_1 : i32, i32, i32
  }
  func.func @transform_8(%arg0: i32) -> (i32, i32) {
    %c0_i32 = arith.constant 0 : i32
    %c0_i32_0 = arith.constant 0 : i32
    %c0_i32_1 = arith.constant 0 : i32
    return %c0_i32, %c0_i32_0 : i32, i32
  }
  func.func @transform_9(%arg0: i32) -> (i32, i32) {
    %c0_i32 = arith.constant 0 : i32
    %c0_i32_0 = arith.constant 0 : i32
    %c0_i32_1 = arith.constant 0 : i32
    return %c0_i32, %c0_i32_0 : i32, i32
  }
  func.func @transform_10(%arg0: i32) -> (i32, i32) {
    %c0_i32 = arith.constant 0 : i32
    %c0_i32_0 = arith.constant 0 : i32
    %c0_i32_1 = arith.constant 0 : i32
    return %c0_i32, %c0_i32_0 : i32, i32
  }
  func.func @transform_11(%arg0: i32) -> (i32, i32, i32) {
    %c0_i32 = arith.constant 0 : i32
    %c0_i32_0 = arith.constant 0 : i32
    %c0_i32_1 = arith.constant 0 : i32
    return %arg0, %c0_i32, %c0_i32_0 : i32, i32, i32
  }
}

</mosaic_0001>

<llo_original>
// kernel: _lambda_.1
$region0: #{_lambda_.1}
  #allocation0 [shape = 'u32[]', space=smem, size = 0x4, offset = 0x4, fixed_abs, tag = 'smem constant byte address 0x4 - core index']
  #allocation1 [shape = 'u32[144,128]{1,0:T(1,128)}', space=vmem, size = 0x12000, scoped, tag = 'internal scratch']
  %s0 = inlined_call_operand.vmem [shape: f32[2,16,64], index: 0, kind: input, shape index: {}]
  %s1 = inlined_call_operand.vmem [shape: f32[5,64,64], index: 1, kind: input, shape index: {}]
  %s2 = inlined_call_operand.hbm [shape: f32[3,64], index: 2, kind: input, shape index: {}]
  %s3 = inlined_call_operand.hbm [shape: f32[64,32], index: 3, kind: input, shape index: {}]
  %s4 = inlined_call_operand.hbm [shape: f32[16,16], index: 4, kind: input, shape index: {}]
  %s5 = inlined_call_operand.hbm [shape: f32[3,32,128], index: 5, kind: input, shape index: {}]
  %s6 = inlined_call_operand.hbm [shape: f32[5,32,32], index: 6, kind: input, shape index: {}]
  %s7 = inlined_call_operand.hbm [shape: f32[3,32,128], index: 7, kind: input, shape index: {}]
  %s8 = inlined_call_operand.vmem [shape: f32[1,128], index: 8, kind: input, shape index: {}]
  %s9 = inlined_call_operand.vmem [shape: f32[128,128], index: 9, kind: input, shape index: {}]
  %s10 = inlined_call_operand.vmem [shape: f32[1,128], index: 10, kind: input, shape index: {}]
  %s11 = inlined_call_operand.vmem [shape: f32[2,8,128], index: 11, kind: output, shape index: {}]
  %s12 = sld [smem:[#allocation0]]
  $region101: #{_lambda_.1} parent=0
    _
  %s14 = ssub.s32 1, %s12
  %s15 = scalar_select 0, %s14, %s12
  $region1: #{_lambda_.1} parent=0
    #allocation2 [shape = 'u8[2048]{0}', space=vmem, size = 0x800, scoped, tag = 'input window, operand 2, single buffered']
    #allocation3 [shape = 's32[2]{0}', space=sflag, size = 0x8, scoped, tag = 'scoped memory for _lambda_.1']
    #allocation4 [shape = 'u8[32768]{0}', space=vmem, size = 0x8000, scoped, tag = 'input window, operand 3, single buffered']
    #allocation5 [shape = 's32[1]{0}', space=sflag, size = 0x4, scoped, tag = 'scoped memory for _lambda_.1']
    #allocation6 [shape = 'u8[8192]{0}', space=vmem, size = 0x2000, scoped, tag = 'input window, operand 4, single buffered']
    #allocation7 [shape = 'u8[49152]{0}', space=vmem, size = 0xc000, scoped, tag = 'input window, operand 5, single buffered']
    #allocation8 [shape = 's32[1]{0}', space=sflag, size = 0x4, scoped, tag = 'scoped memory for _lambda_.1']
    #allocation9 [shape = 'u8[81920]{0}', space=vmem, size = 0x14000, scoped, tag = 'input window, operand 6, single buffered']
    #allocation10 [shape = 'u8[49152]{0}', space=vmem, size = 0xc000, scoped, tag = 'input window, operand 7, single buffered']
    #allocation11 [shape = 's32[1]{0}', space=sflag, size = 0x4, scoped, tag = 'scoped memory for _lambda_.1']
    %16 = vsyncpa [#allocation3], 0
    %17 = vsyncpa [#allocation5], 0
    %18 = vsyncpa [#allocation8], 0
    %19 = vsyncpa [#allocation11], 0
    loop: start=0, step=1, limit=4
    $region2: #{_lambda_.1} parent=1 // loop_pre_header
      _
    $region3: #{_lambda_.1} parent=1 // loop_header
      %s21 = sphi 0, %s25
      %p22 = scmp.ge.s32.totalorder %s21, 4
      %s31 = sphi 0, %s33
      %s34 = sphi 0, %s31
      %s35 = sphi 0, %s34
      %s51 = sphi 0, %s35
      %s55 = sphi 0, %s55
      %s57 = sphi 0, %s55
      %s58 = sphi 0, %s57
      %s72 = sphi 0, %s58
      %s76 = sphi 0, %s76
      %s78 = sphi 0, %s76
      %s79 = sphi 0, %s78
      %s93 = sphi 0, %s79
      %s97 = sphi 0, %s97
      %s99 = sphi 0, %s97
      %s100 = sphi 0, %s99
      %s114 = sphi 0, %s100
      %s118 = sphi 0, %s118
      %s120 = sphi 0, %s118
      %s121 = sphi 0, %s120
      %s135 = sphi 0, %s121
      %s139 = sphi 0, %s139
      %s141 = sphi 0, %s139
      %s142 = sphi 0, %s141
      %s156 = sphi 0, %s142
      %s160 = sphi 0, %s160
      %s162 = sphi 0, %s160
      %s163 = sphi 0, %s162
      %s177 = sphi 0, %s163
      %s181 = sphi 0, %s181
      %s183 = sphi 0, %s181
      %s184 = sphi 0, %s183
      %s198 = sphi 0, %s184
      %s202 = sphi 0, %s202
      %s204 = sphi 0, %s202
      %s205 = sphi 0, %s204
      %s219 = sphi 0, %s205
      %s223 = sphi 0, %s223
      %s225 = sphi 0, %s223
      %s226 = sphi 0, %s225
      %s240 = sphi 0, %s226
      %s244 = sphi 0, %s244
      %s246 = sphi 0, %s244
      %s247 = sphi 0, %s246
      %s261 = sphi 0, %s247
      %s267 = sphi 0, %s269
      %s270 = sphi 0, %s267
      %s271 = sphi 0, %s270
      %s287 = sphi 0, %s271
    $region4: #{_lambda_.1} parent=1 // loop_header_branch
      %24 = sbr.rel (%p22) target = $region8
    $region5: #{_lambda_.1} parent=1 // loop_body
      %s26 = ssub.s32 %s21, 1
      %s27 = ssub.s32 %s21, 2
      %s28 = sadd.s32 %s21, 1
      %s29 = ssub.s32 %s21, %s28
      %p30 = scmp.eq.s32.totalorder %s29, 0
      %s32 = sadd.s32 %s31, 1
      %s33 = scalar_select %p30, %s31, %s32
      %p36 = pneg %p30
      %p37 = scmp.eq.s32.totalorder %s21, 1
      %p38 = por %p36, %p37
      %p39 = scmp.ne.s32.totalorder %s31, %s34
      %p40 = scmp.eq.s32.totalorder %s21, 0
      %p41 = por %p39, %p40
      %p42 = scmp.ne.s32.totalorder %s31, %s34
      %p43 = scmp.eq.s32.totalorder %s26, 1
      %p44 = por %p42, %p43
      %p45 = scmp.ne.s32.totalorder %s34, %s35
      %p46 = scmp.eq.s32.totalorder %s26, 0
      %p47 = por %p45, %p46
      %p48 = scmp.ne.s32.totalorder %s34, %s35
      %p49 = scmp.eq.s32.totalorder %s27, 1
      %p50 = por %p48, %p49
      %p52 = scmp.ne.s32.totalorder %s35, %s51
      %p53 = scmp.eq.s32.totalorder %s27, 0
      %p54 = por %p52, %p53
      %s56 = sadd.s32 %s55, 1
      %p59 = scmp.eq.s32.totalorder %s21, 1
      %p60 = scmp.ne.s32.totalorder %s55, %s57
      %p61 = scmp.eq.s32.totalorder %s21, 0
      %p62 = por %p60, %p61
      %p63 = scmp.ne.s32.totalorder %s55, %s57
      %p64 = scmp.eq.s32.totalorder %s26, 1
      %p65 = por %p63, %p64
      %p66 = scmp.ne.s32.totalorder %s57, %s58
      %p67 = scmp.eq.s32.totalorder %s26, 0
      %p68 = por %p66, %p67
      %p69 = scmp.ne.s32.totalorder %s57, %s58
      %p70 = scmp.eq.s32.totalorder %s27, 1
      %p71 = por %p69, %p70
      %p73 = scmp.ne.s32.totalorder %s58, %s72
      %p74 = scmp.eq.s32.totalorder %s27, 0
      %p75 = por %p73, %p74
      %s77 = sadd.s32 %s76, 1
      %p80 = scmp.eq.s32.totalorder %s21, 1
      %p81 = scmp.ne.s32.totalorder %s76, %s78
      %p82 = scmp.eq.s32.totalorder %s21, 0
      %p83 = por %p81, %p82
      %p84 = scmp.ne.s32.totalorder %s76, %s78
      %p85 = scmp.eq.s32.totalorder %s26, 1
      %p86 = por %p84, %p85
      %p87 = scmp.ne.s32.totalorder %s78, %s79
      %p88 = scmp.eq.s32.totalorder %s26, 0
      %p89 = por %p87, %p88
      %p90 = scmp.ne.s32.totalorder %s78, %s79
      %p91 = scmp.eq.s32.totalorder %s27, 1
      %p92 = por %p90, %p91
      %p94 = scmp.ne.s32.totalorder %s79, %s93
      %p95 = scmp.eq.s32.totalorder %s27, 0
      %p96 = por %p94, %p95
      %s98 = sadd.s32 %s97, 1
      %p101 = scmp.eq.s32.totalorder %s21, 1
      %p102 = scmp.ne.s32.totalorder %s97, %s99
      %p103 = scmp.eq.s32.totalorder %s21, 0
      %p104 = por %p102, %p103
      %p105 = scmp.ne.s32.totalorder %s97, %s99
      %p106 = scmp.eq.s32.totalorder %s26, 1
      %p107 = por %p105, %p106
      %p108 = scmp.ne.s32.totalorder %s99, %s100
      %p109 = scmp.eq.s32.totalorder %s26, 0
      %p110 = por %p108, %p109
      %p111 = scmp.ne.s32.totalorder %s99, %s100
      %p112 = scmp.eq.s32.totalorder %s27, 1
      %p113 = por %p111, %p112
      %p115 = scmp.ne.s32.totalorder %s100, %s114
      %p116 = scmp.eq.s32.totalorder %s27, 0
      %p117 = por %p115, %p116
      %s119 = sadd.s32 %s118, 1
      %p122 = scmp.eq.s32.totalorder %s21, 1
      %p123 = scmp.ne.s32.totalorder %s118, %s120
      %p124 = scmp.eq.s32.totalorder %s21, 0
      %p125 = por %p123, %p124
      %p126 = scmp.ne.s32.totalorder %s118, %s120
      %p127 = scmp.eq.s32.totalorder %s26, 1
      %p128 = por %p126, %p127
      %p129 = scmp.ne.s32.totalorder %s120, %s121
      %p130 = scmp.eq.s32.totalorder %s26, 0
      %p131 = por %p129, %p130
      %p132 = scmp.ne.s32.totalorder %s120, %s121
      %p133 = scmp.eq.s32.totalorder %s27, 1
      %p134 = por %p132, %p133
      %p136 = scmp.ne.s32.totalorder %s121, %s135
      %p137 = scmp.eq.s32.totalorder %s27, 0
      %p138 = por %p136, %p137
      %s140 = sadd.s32 %s139, 1
      %p143 = scmp.eq.s32.totalorder %s21, 1
      %p144 = scmp.ne.s32.totalorder %s139, %s141
      %p145 = scmp.eq.s32.totalorder %s21, 0
      %p146 = por %p144, %p145
      %p147 = scmp.ne.s32.totalorder %s139, %s141
      %p148 = scmp.eq.s32.totalorder %s26, 1
      %p149 = por %p147, %p148
      %p150 = scmp.ne.s32.totalorder %s141, %s142
      %p151 = scmp.eq.s32.totalorder %s26, 0
      %p152 = por %p150, %p151
      %p153 = scmp.ne.s32.totalorder %s141, %s142
      %p154 = scmp.eq.s32.totalorder %s27, 1
      %p155 = por %p153, %p154
      %p157 = scmp.ne.s32.totalorder %s142, %s156
      %p158 = scmp.eq.s32.totalorder %s27, 0
      %p159 = por %p157, %p158
      %s161 = sadd.s32 %s160, 1
      %p164 = scmp.eq.s32.totalorder %s21, 1
      %p165 = scmp.ne.s32.totalorder %s160, %s162
      %p166 = scmp.eq.s32.totalorder %s21, 0
      %p167 = por %p165, %p166
      %p168 = scmp.ne.s32.totalorder %s160, %s162
      %p169 = scmp.eq.s32.totalorder %s26, 1
      %p170 = por %p168, %p169
      %p171 = scmp.ne.s32.totalorder %s162, %s163
      %p172 = scmp.eq.s32.totalorder %s26, 0
      %p173 = por %p171, %p172
      %p174 = scmp.ne.s32.totalorder %s162, %s163
      %p175 = scmp.eq.s32.totalorder %s27, 1
      %p176 = por %p174, %p175
      %p178 = scmp.ne.s32.totalorder %s163, %s177
      %p179 = scmp.eq.s32.totalorder %s27, 0
      %p180 = por %p178, %p179
      %s182 = sadd.s32 %s181, 1
      %p185 = scmp.eq.s32.totalorder %s21, 1
      %p186 = scmp.ne.s32.totalorder %s181, %s183
      %p187 = scmp.eq.s32.totalorder %s21, 0
      %p188 = por %p186, %p187
      %p189 = scmp.ne.s32.totalorder %s181, %s183
      %p190 = scmp.eq.s32.totalorder %s26, 1
      %p191 = por %p189, %p190
      %p192 = scmp.ne.s32.totalorder %s183, %s184
      %p193 = scmp.eq.s32.totalorder %s26, 0
      %p194 = por %p192, %p193
      %p195 = scmp.ne.s32.totalorder %s183, %s184
      %p196 = scmp.eq.s32.totalorder %s27, 1
      %p197 = por %p195, %p196
      %p199 = scmp.ne.s32.totalorder %s184, %s198
      %p200 = scmp.eq.s32.totalorder %s27, 0
      %p201 = por %p199, %p200
      %s203 = sadd.s32 %s202, 1
      %p206 = scmp.eq.s32.totalorder %s21, 1
      %p207 = scmp.ne.s32.totalorder %s202, %s204
      %p208 = scmp.eq.s32.totalorder %s21, 0
      %p209 = por %p207, %p208
      %p210 = scmp.ne.s32.totalorder %s202, %s204
      %p211 = scmp.eq.s32.totalorder %s26, 1
      %p212 = por %p210, %p211
      %p213 = scmp.ne.s32.totalorder %s204, %s205
      %p214 = scmp.eq.s32.totalorder %s26, 0
      %p215 = por %p213, %p214
      %p216 = scmp.ne.s32.totalorder %s204, %s205
      %p217 = scmp.eq.s32.totalorder %s27, 1
      %p218 = por %p216, %p217
      %p220 = scmp.ne.s32.totalorder %s205, %s219
      %p221 = scmp.eq.s32.totalorder %s27, 0
      %p222 = por %p220, %p221
      %s224 = sadd.s32 %s223, 1
      %p227 = scmp.eq.s32.totalorder %s21, 1
      %p228 = scmp.ne.s32.totalorder %s223, %s225
      %p229 = scmp.eq.s32.totalorder %s21, 0
      %p230 = por %p228, %p229
      %p231 = scmp.ne.s32.totalorder %s223, %s225
      %p232 = scmp.eq.s32.totalorder %s26, 1
      %p233 = por %p231, %p232
      %p234 = scmp.ne.s32.totalorder %s225, %s226
      %p235 = scmp.eq.s32.totalorder %s26, 0
      %p236 = por %p234, %p235
      %p237 = scmp.ne.s32.totalorder %s225, %s226
      %p238 = scmp.eq.s32.totalorder %s27, 1
      %p239 = por %p237, %p238
      %p241 = scmp.ne.s32.totalorder %s226, %s240
      %p242 = scmp.eq.s32.totalorder %s27, 0
      %p243 = por %p241, %p242
      %s245 = sadd.s32 %s244, 1
      %p248 = scmp.eq.s32.totalorder %s21, 1
      %p249 = scmp.ne.s32.totalorder %s244, %s246
      %p250 = scmp.eq.s32.totalorder %s21, 0
      %p251 = por %p249, %p250
      %p252 = scmp.ne.s32.totalorder %s244, %s246
      %p253 = scmp.eq.s32.totalorder %s26, 1
      %p254 = por %p252, %p253
      %p255 = scmp.ne.s32.totalorder %s246, %s247
      %p256 = scmp.eq.s32.totalorder %s26, 0
      %p257 = por %p255, %p256
      %p258 = scmp.ne.s32.totalorder %s246, %s247
      %p259 = scmp.eq.s32.totalorder %s27, 1
      %p260 = por %p258, %p259
      %p262 = scmp.ne.s32.totalorder %s247, %s261
      %p263 = scmp.eq.s32.totalorder %s27, 0
      %p264 = por %p262, %p263
      %s265 = ssub.s32 %s21, %s28
      %p266 = scmp.eq.s32.totalorder %s265, 0
      %s268 = sadd.s32 %s267, 1
      %s269 = scalar_select %p266, %s267, %s268
      %p272 = pneg %p266
      %p273 = scmp.eq.s32.totalorder %s21, 1
      %p274 = por %p272, %p273
      %p275 = scmp.ne.s32.totalorder %s267, %s270
      %p276 = scmp.eq.s32.totalorder %s21, 0
      %p277 = por %p275, %p276
      %p278 = scmp.ne.s32.totalorder %s267, %s270
      %p279 = scmp.eq.s32.totalorder %s26, 1
      %p280 = por %p278, %p279
      %p281 = scmp.ne.s32.totalorder %s270, %s271
      %p282 = scmp.eq.s32.totalorder %s26, 0
      %p283 = por %p281, %p282
      %p284 = scmp.ne.s32.totalorder %s270, %s271
      %p285 = scmp.eq.s32.totalorder %s27, 1
      %p286 = por %p284, %p285
      %p288 = scmp.ne.s32.totalorder %s271, %s287
      %p289 = scmp.eq.s32.totalorder %s27, 0
      %p290 = por %p288, %p289
      %p291 = scmp.le.s32.totalorder 1, %s21
      %p292 = scmp.lt.s32.totalorder %s21, 3
      %p293 = pnand %p291, %p292
      %p294 = pneg %p293
      // Predicated region
      $region9: #{_lambda_.1} parent=5 // pred_check
        _
      $region10: #{_lambda_.1} parent=5 // pred_check_branch
        %296 = sbr.rel (%p293) target = $region12
      $region11: #{_lambda_.1} parent=5 // pred_region
        %s297 = ssub.s32 %s21, 1
        // Predicated region
        $region13: #{_lambda_.1} parent=11 // pred_check
          %p298 = pneg %p68
        $region14: #{_lambda_.1} parent=11 // pred_check_branch
          %300 = sbr.rel (%p298) target = $region16
        $region15: #{_lambda_.1} parent=11 // pred_region
          _
        $region16: #{_lambda_.1} parent=11 // pred_fallthru
          _
        // Predicated region
        $region17: #{_lambda_.1} parent=11 // pred_check
          %p301 = pneg %p89
        $region18: #{_lambda_.1} parent=11 // pred_check_branch
          %303 = sbr.rel (%p301) target = $region20
        $region19: #{_lambda_.1} parent=11 // pred_region
          %s305 = ssub.s32 64, 64
          %306 = vsyncadd [#allocation3], %s305
          %s308 = sshll.u32 [#allocation2], 4
          %s309 = int_to_ptr.vmem [resolvable:$true] %s308
          %311 = dma.hbm_to_vmem [thread:$0]  %s2, 64, %s309, [#allocation3]
        $region20: #{_lambda_.1} parent=11 // pred_fallthru
          _
        // Predicated region
        $region21: #{_lambda_.1} parent=11 // pred_check
          %p312 = pneg %p110
        $region22: #{_lambda_.1} parent=11 // pred_check_branch
          %314 = sbr.rel (%p312) target = $region24
        $region23: #{_lambda_.1} parent=11 // pred_region
          %s316 = ssub.s32 1024, 1024
          %317 = vsyncadd [#allocation5], %s316
          %s318 = sshll.u32 [#allocation4], 4
          %s319 = int_to_ptr.vmem [resolvable:$true] %s318
          %324 = dma.hbm_to_vmem [thread:$0]  %s3, 1024, %s319, [#allocation5], 128, 128, 8
        $region24: #{_lambda_.1} parent=11 // pred_fallthru
          _
        // Predicated region
        $region25: #{_lambda_.1} parent=11 // pred_check
          %p325 = pneg %p131
        $region26: #{_lambda_.1} parent=11 // pred_check_branch
          %327 = sbr.rel (%p325) target = $region28
        $region27: #{_lambda_.1} parent=11 // pred_region
          %s329 = ssub.s32 256, 256
          %330 = vsyncadd [#allocation5], %s329
          %s331 = sshll.u32 [#allocation6], 4
          %s332 = int_to_ptr.vmem [resolvable:$true] %s331
          %337 = dma.hbm_to_vmem [thread:$0]  %s4, 256, %s332, [#allocation5], 128, 128, 8
        $region28: #{_lambda_.1} parent=11 // pred_fallthru
          _
        // Predicated region
        $region29: #{_lambda_.1} parent=11 // pred_check
          %p338 = pneg %p152
        $region30: #{_lambda_.1} parent=11 // pred_check_branch
          %340 = sbr.rel (%p338) target = $region32
        $region31: #{_lambda_.1} parent=11 // pred_region
          %s342 = ssub.s32 1536, 1536
          %343 = vsyncadd [#allocation8], %s342
          %s344 = sshll.u32 [#allocation7], 4
          %s345 = int_to_ptr.vmem [resolvable:$true] %s344
          %350 = dma.hbm_to_vmem [thread:$0]  %s5, 1536, %s345, [#allocation8], 128, 128, 8
        $region32: #{_lambda_.1} parent=11 // pred_fallthru
          _
        // Predicated region
        $region33: #{_lambda_.1} parent=11 // pred_check
          %p351 = pneg %p173
        $region34: #{_lambda_.1} parent=11 // pred_check_branch
          %353 = sbr.rel (%p351) target = $region36
        $region35: #{_lambda_.1} parent=11 // pred_region
          %s355 = ssub.s32 2560, 2560
          %356 = vsyncadd [#allocation8], %s355
          %s357 = sshll.u32 [#allocation9], 4
          %s358 = int_to_ptr.vmem [resolvable:$true] %s357
          %363 = dma.hbm_to_vmem [thread:$0]  %s6, 2560, %s358, [#allocation8], 128, 128, 8
        $region36: #{_lambda_.1} parent=11 // pred_fallthru
          _
        // Predicated region
        $region37: #{_lambda_.1} parent=11 // pred_check
          %p364 = pneg %p194
        $region38: #{_lambda_.1} parent=11 // pred_check_branch
          %366 = sbr.rel (%p364) target = $region40
        $region39: #{_lambda_.1} parent=11 // pred_region
          %s368 = ssub.s32 1536, 1536
          %369 = vsyncadd [#allocation11], %s368
          %s370 = sshll.u32 [#allocation10], 4
          %s371 = int_to_ptr.vmem [resolvable:$true] %s370
          %376 = dma.hbm_to_vmem [thread:$0]  %s7, 1536, %s371, [#allocation11], 128, 128, 8
        $region40: #{_lambda_.1} parent=11 // pred_fallthru
          _
        // Predicated region
        $region41: #{_lambda_.1} parent=11 // pred_check
          %p377 = pneg %p215
        $region42: #{_lambda_.1} parent=11 // pred_check_branch
          %379 = sbr.rel (%p377) target = $region44
        $region43: #{_lambda_.1} parent=11 // pred_region
          _
        $region44: #{_lambda_.1} parent=11 // pred_fallthru
          _
        // Predicated region
        $region45: #{_lambda_.1} parent=11 // pred_check
          %p380 = pneg %p236
        $region46: #{_lambda_.1} parent=11 // pred_check_branch
          %382 = sbr.rel (%p380) target = $region48
        $region47: #{_lambda_.1} parent=11 // pred_region
          _
        $region48: #{_lambda_.1} parent=11 // pred_fallthru
          _
        // Predicated region
        $region49: #{_lambda_.1} parent=11 // pred_check
          %p383 = pneg %p257
        $region50: #{_lambda_.1} parent=11 // pred_check_branch
          %385 = sbr.rel (%p383) target = $region52
        $region51: #{_lambda_.1} parent=11 // pred_region
          _
        $region52: #{_lambda_.1} parent=11 // pred_fallthru
          _
      $region12: #{_lambda_.1} parent=5 // pred_fallthru
        _
      %p386 = scmp.lt.s32.totalorder %s21, 2
      // Predicated region
      $region53: #{_lambda_.1} parent=5 // pred_check
        %p387 = pneg %p386
      $region54: #{_lambda_.1} parent=5 // pred_check_branch
        %389 = sbr.rel (%p387) target = $region56
      $region55: #{_lambda_.1} parent=5 // pred_region
        // Predicated region
        $region57: #{_lambda_.1} parent=55 // pred_check
          %p390 = pneg %p41
        $region58: #{_lambda_.1} parent=55 // pred_check_branch
          %392 = sbr.rel (%p390) target = $region60
        $region59: #{_lambda_.1} parent=55 // pred_region
          %p393 = scmp.lt.s32.totalorder %s21, 1
          %s394 = scalar_select %p393, %s21, 1
          %s395 = smul.addr %s394, 2
          %s396 = smul.addr %s395, 8
          %s397 = scalar_lea.vmem %s0, %s396
        $region60: #{_lambda_.1} parent=55 // pred_fallthru
          _
      $region56: #{_lambda_.1} parent=5 // pred_fallthru
        _
      %p398 = scmp.le.s32.totalorder 1, %s21
      %p399 = scmp.lt.s32.totalorder %s21, 3
      %p400 = pnand %p398, %p399
      %p401 = pneg %p400
      // Predicated region
      $region61: #{_lambda_.1} parent=5 // pred_check
        _
      $region62: #{_lambda_.1} parent=5 // pred_check_branch
        %403 = sbr.rel (%p400) target = $region64
      $region63: #{_lambda_.1} parent=5 // pred_region
        %s404 = ssub.s32 %s21, 1
        // Predicated region
        $region65: #{_lambda_.1} parent=63 // pred_check
          %p405 = pneg %p89
        $region66: #{_lambda_.1} parent=63 // pred_check_branch
          %407 = sbr.rel (%p405) target = $region68
        $region67: #{_lambda_.1} parent=63 // pred_region
          %408 = dma.done [#allocation3], 64
        $region68: #{_lambda_.1} parent=63 // pred_fallthru
          _
        // Predicated region
        $region69: #{_lambda_.1} parent=63 // pred_check
          %p409 = pneg %p110
        $region70: #{_lambda_.1} parent=63 // pred_check_branch
          %411 = sbr.rel (%p409) target = $region72
        $region71: #{_lambda_.1} parent=63 // pred_region
          %412 = dma.done [#allocation5], 1024
        $region72: #{_lambda_.1} parent=63 // pred_fallthru
          _
        // Predicated region
        $region73: #{_lambda_.1} parent=63 // pred_check
          %p413 = pneg %p131
        $region74: #{_lambda_.1} parent=63 // pred_check_branch
          %415 = sbr.rel (%p413) target = $region76
        $region75: #{_lambda_.1} parent=63 // pred_region
          %416 = dma.done [#allocation5], 256
        $region76: #{_lambda_.1} parent=63 // pred_fallthru
          _
        // Predicated region
        $region77: #{_lambda_.1} parent=63 // pred_check
          %p417 = pneg %p152
        $region78: #{_lambda_.1} parent=63 // pred_check_branch
          %419 = sbr.rel (%p417) target = $region80
        $region79: #{_lambda_.1} parent=63 // pred_region
          %420 = dma.done [#allocation8], 1536
        $region80: #{_lambda_.1} parent=63 // pred_fallthru
          _
        // Predicated region
        $region81: #{_lambda_.1} parent=63 // pred_check
          %p421 = pneg %p173
        $region82: #{_lambda_.1} parent=63 // pred_check_branch
          %423 = sbr.rel (%p421) target = $region84
        $region83: #{_lambda_.1} parent=63 // pred_region
          %424 = dma.done [#allocation8], 2560
        $region84: #{_lambda_.1} parent=63 // pred_fallthru
          _
        // Predicated region
        $region85: #{_lambda_.1} parent=63 // pred_check
          %p425 = pneg %p194
        $region86: #{_lambda_.1} parent=63 // pred_check_branch
          %427 = sbr.rel (%p425) target = $region88
        $region87: #{_lambda_.1} parent=63 // pred_region
          %428 = dma.done [#allocation11], 1536
        $region88: #{_lambda_.1} parent=63 // pred_fallthru
          _
        %p429 = scmp.lt.s32.totalorder %s26, 1
        %s430 = scalar_select %p429, %s26, 1
        %s431 = smul.addr %s430, 2
        %s432 = smul.addr %s431, 8
        %s433 = scalar_lea.vmem %s0, %s432
        %p434 = pneg %p47
        %p435 = pneg %p44
        %p436 = pneg %p68
        %p437 = pneg %p65
        %p438 = pneg %p89
        %p439 = pneg %p86
        %p440 = pneg %p110
        %p441 = pneg %p107
        %p442 = pneg %p131
        %p443 = pneg %p128
        %p444 = pneg %p152
        %p445 = pneg %p149
        %p446 = pneg %p173
        %p447 = pneg %p170
        %p448 = pneg %p194
        %p449 = pneg %p191
        %p450 = pneg %p215
        %p451 = pneg %p212
        %p452 = pneg %p236
        %p453 = pneg %p233
        %p454 = pneg %p257
        %p455 = pneg %p254
        %p456 = pneg %p283
        %p457 = pneg %p280
        %p458 = scmp.lt.s32.totalorder %s26, 1
        %s459 = scalar_select %p458, %s26, 1
        %s460 = smul.addr %s459, 8
        %s461 = scalar_lea.vmem %s11, %s460
        %p462 = scmp.lt.s32.totalorder %s26, 1
        %s463 = scalar_select %p462, %s26, 1
        %s464 = smul.addr %s463, 2
        %s465 = smul.addr %s464, 8
        %s466 = scalar_lea.vmem %s0, %s465
        %p467 = scmp.lt.s32.totalorder %s26, 1
        %s468 = scalar_select %p467, %s26, 1
        %s469 = smul.addr %s468, 8
        %s470 = scalar_lea.vmem %s11, %s469
        %v471 = vld [vmem:[%s466] sm:$0xff]
        %v472 = vld [vmem:[%s466 + $0x8] sm:$0xff]
        %v473 = vlaneseq
        %v474 = vshrl.u32 %v473, 7
        %v475 = vadd.s32 %v474, 8
        %v476 = vadd.s32 %v474, 16
        %v477 = vlaneseq
        %v478 = vand.u32 %v477, 127
        %v479 = vadd.s32 %v478, 2
        %vm480 = vcmp.eq.s32.totalorder %v474, %v479
        %vm481 = vcmp.eq.s32.totalorder %v475, %v479
        %vm482 = vcmp.eq.s32.totalorder %v476, %v479
        %v483 = vsel %vm480, 1, 0
        %v484 = vsel %vm481, 1, 0
        %v485 = vsel %vm482, 1, 0
        %v486 = vcvt.s32.f32 %v483
        %v487 = vcvt.s32.f32 %v484
        %v488 = vcvt.s32.f32 %v485
        %vm489 = vcmask 130048
        %v491 = vsel %vm489, %v486, 0
        %v494 = vsel %vm489, %v487, 0
        %v497 = vsel %vm489, %v488, 0
        %499 = vmatprep.subr.mxu0 0.0
        %500 = vmatpush1.msra.mxu0 %v471
        %501 = vmatprep.subr.mxu0 0.0
        %502 = vmatpush1.msra.mxu0 %v472
        %503 = vmatprep.subr.mxu0 0.0
        %504 = vmatpush1.msra.mxu0 0.0
        %505 = vmatprep.subr.mxu0 0.0
        %506 = vmatpush1.msra.mxu0 0.0
        %507 = vmatprep.subr.mxu0 0.0
        %508 = vmatpush1.msra.mxu0 0.0
        %509 = vmatprep.subr.mxu0 0.0
        %510 = vmatpush1.msra.mxu0 0.0
        %511 = vmatprep.subr.mxu0 0.0
        %512 = vmatpush1.msra.mxu0 0.0
        %513 = vmatprep.subr.mxu0 0.0
        %514 = vmatpush1.msra.mxu0 0.0
        %515 = vmatprep.subr.mxu0 0.0
        %516 = vmatpush1.msra.mxu0 0.0
        %517 = vmatprep.subr.mxu0 0.0
        %518 = vmatpush1.msra.mxu0 0.0
        %519 = vmatprep.subr.mxu0 0.0
        %520 = vmatpush1.msra.mxu0 0.0
        %521 = vmatprep.subr.mxu0 0.0
        %522 = vmatpush1.msra.mxu0 0.0
        %523 = vmatprep.subr.mxu0 0.0
        %524 = vmatpush1.msra.mxu0 0.0
        %525 = vmatprep.subr.mxu0 0.0
        %526 = vmatpush1.msra.mxu0 0.0
        %527 = vmatprep.subr.mxu0 0.0
        %528 = vmatpush1.msra.mxu0 0.0
        %529 = vmatprep.subr.mxu0 0.0
        %530 = vmatpush1.msra.mxu0 0.0
        %531 = vmatprep.subr.mxu0 0.0
        %532 = vmatpush1.msra.mxu0 0.0
        %533 = vmatprep.subr.mxu0 0.0
        %534 = vmatpush1.msra.mxu0 0.0
        %535 = vmatprep.subr.mxu0 0.0
        %536 = vmatpush1.msra.mxu0 0.0
        %537 = vmatprep.subr.mxu0 0.0
        %538 = vmatpush1.msra.mxu0 0.0
        %539 = vmatprep.subr.mxu0 0.0
        %540 = vmatpush1.msra.mxu0 0.0
        %541 = vmatprep.subr.mxu0 0.0
        %542 = vmatpush1.msra.mxu0 0.0
        %543 = vmatprep.subr.mxu0 0.0
        %544 = vmatpush1.msra.mxu0 0.0
        %545 = vmatprep.subr.mxu0 0.0
        %546 = vmatpush1.msra.mxu0 0.0
        %547 = vmatprep.subr.mxu0 0.0
        %548 = vmatpush1.msra.mxu0 0.0
        %549 = vmatprep.subr.mxu0 0.0
        %550 = vmatpush1.msra.mxu0 0.0
        %551 = vmatprep.subr.mxu0 0.0
        %552 = vmatpush1.msra.mxu0 0.0
        %553 = vmatprep.subr.mxu0 0.0
        %554 = vmatpush1.msra.mxu0 0.0
        %555 = vmatprep.subr.mxu0 0.0
        %556 = vmatpush1.msra.mxu0 0.0
        %557 = vmatprep.subr.mxu0 0.0
        %558 = vmatpush1.msra.mxu0 0.0
        %559 = vmatprep.subr.mxu0 0.0
        %560 = vmatpush1.msra.mxu0 0.0
        %561 = vmatprep.subr.mxu0 0.0
        %562 = vmatpush1.msra.mxu0 0.0
        %563 = vmatprep.mubr.f32.mxu0 0.0
        %564 = vmatmul.mubr.f32.gmra.mrb[0].mxu0 %v491
        %v565 = vpop.f32.mrb[0].mxu0
        %v566 = vadd.f32 0.0, %v565
        %v567 = vpop.f32.mrb[0].mxu0
        %568 = vmatprep.mubr.f32.mxu0 0.0
        %569 = vmatmul.mubr.f32.gmra.mrb[0].mxu0 %v494
        %v570 = vpop.f32.mrb[0].mxu0
        %v571 = vadd.f32 0.0, %v570
        %v572 = vpop.f32.mrb[0].mxu0
        %573 = vmatprep.mubr.f32.mxu0 0.0
        %574 = vmatmul.mubr.f32.gmra.mrb[0].mxu0 %v497
        %v575 = vpop.f32.mrb[0].mxu0
        %v576 = vadd.f32 0.0, %v575
        %v577 = vpop.f32.mrb[0].mxu0
        %578 = vdwg.mxu0
        %v579 = vld [vmem:[%s1] sm:$0xff]
        %v580 = vld [vmem:[%s1 + $0x8] sm:$0xff]
        %v581 = vld [vmem:[%s1 + $0x10] sm:$0xff]
        %v582 = vld [vmem:[%s1 + $0x18] sm:$0xff]
        %v583 = vld [vmem:[%s1 + $0x20] sm:$0xff]
        %v584 = vld [vmem:[%s1 + $0x28] sm:$0xff]
        %v585 = vld [vmem:[%s1 + $0x30] sm:$0xff]
        %v586 = vld [vmem:[%s1 + $0x38] sm:$0xff]
        %s587 = scalar_lea.vmem %s1, 64
        %v588 = vld [vmem:[%s587] sm:$0xff]
        %v589 = vld [vmem:[%s587 + $0x8] sm:$0xff]
        %v590 = vld [vmem:[%s587 + $0x10] sm:$0xff]
        %v591 = vld [vmem:[%s587 + $0x18] sm:$0xff]
        %v592 = vld [vmem:[%s587 + $0x20] sm:$0xff]
        %v593 = vld [vmem:[%s587 + $0x28] sm:$0xff]
        %v594 = vld [vmem:[%s587 + $0x30] sm:$0xff]
        %v595 = vld [vmem:[%s587 + $0x38] sm:$0xff]
        %vm599 = vcmask 1046528
        %v600 = vrot.slane %v566, 1
        %v601 = vrot.slane %v571, 1
        %v602 = vsel %vm599, %v600, %v601
        %v603 = vrot.slane %v576, 1
        %v604 = vsel %vm599, %v601, %v603
        %vm605 = vcmask 523264
        %v606 = vsel %vm605, %v602, 0
        %v608 = vsel %vm605, %v604, 0
        %610 = vmatprep.subr.mxu0 0.0
        %611 = vmatpush1.msra.mxu0 %v588
        %612 = vmatprep.subr.mxu0 0.0
        %613 = vmatpush1.msra.mxu0 %v589
        %614 = vmatprep.subr.mxu0 0.0
        %615 = vmatpush1.msra.mxu0 %v590
        %616 = vmatprep.subr.mxu0 0.0
        %617 = vmatpush1.msra.mxu0 %v591
        %618 = vmatprep.subr.mxu0 0.0
        %619 = vmatpush1.msra.mxu0 %v592
        %620 = vmatprep.subr.mxu0 0.0
        %621 = vmatpush1.msra.mxu0 %v593
        %622 = vmatprep.subr.mxu0 0.0
        %623 = vmatpush1.msra.mxu0 %v594
        %624 = vmatprep.subr.mxu0 0.0
        %625 = vmatpush1.msra.mxu0 %v595
        %626 = vmatprep.subr.mxu0 0.0
        %627 = vmatpush1.msra.mxu0 0.0
        %628 = vmatprep.subr.mxu0 0.0
        %629 = vmatpush1.msra.mxu0 0.0
        %630 = vmatprep.subr.mxu0 0.0
        %631 = vmatpush1.msra.mxu0 0.0
        %632 = vmatprep.subr.mxu0 0.0
        %633 = vmatpush1.msra.mxu0 0.0
        %634 = vmatprep.subr.mxu0 0.0
        %635 = vmatpush1.msra.mxu0 0.0
        %636 = vmatprep.subr.mxu0 0.0
        %637 = vmatpush1.msra.mxu0 0.0
        %638 = vmatprep.subr.mxu0 0.0
        %639 = vmatpush1.msra.mxu0 0.0
        %640 = vmatprep.subr.mxu0 0.0
        %641 = vmatpush1.msra.mxu0 0.0
        %642 = vmatprep.subr.mxu0 0.0
        %643 = vmatpush1.msra.mxu0 0.0
        %644 = vmatprep.subr.mxu0 0.0
        %645 = vmatpush1.msra.mxu0 0.0
        %646 = vmatprep.subr.mxu0 0.0
        %647 = vmatpush1.msra.mxu0 0.0
        %648 = vmatprep.subr.mxu0 0.0
        %649 = vmatpush1.msra.mxu0 0.0
        %650 = vmatprep.subr.mxu0 0.0
        %651 = vmatpush1.msra.mxu0 0.0
        %652 = vmatprep.subr.mxu0 0.0
        %653 = vmatpush1.msra.mxu0 0.0
        %654 = vmatprep.subr.mxu0 0.0
        %655 = vmatpush1.msra.mxu0 0.0
        %656 = vmatprep.subr.mxu0 0.0
        %657 = vmatpush1.msra.mxu0 0.0
        %658 = vmatprep.subr.mxu0 0.0
        %659 = vmatpush1.msra.mxu0 0.0
        %660 = vmatprep.subr.mxu0 0.0
        %661 = vmatpush1.msra.mxu0 0.0
        %662 = vmatprep.subr.mxu0 0.0
        %663 = vmatpush1.msra.mxu0 0.0
        %664 = vmatprep.subr.mxu0 0.0
        %665 = vmatpush1.msra.mxu0 0.0
        %666 = vmatprep.subr.mxu0 0.0
        %667 = vmatpush1.msra.mxu0 0.0
        %668 = vmatprep.subr.mxu0 0.0
        %669 = vmatpush1.msra.mxu0 0.0
        %670 = vmatprep.subr.mxu0 0.0
        %671 = vmatpush1.msra.mxu0 0.0
        %672 = vmatprep.subr.mxu0 0.0
        %673 = vmatpush1.msra.mxu0 0.0
        %674 = vmatprep.mubr.f32.mxu0 0.0
        %675 = vmatmul.mubr.f32.gmra.mrb[0].mxu0 %v606
        %v676 = vpop.f32.mrb[0].mxu0
        %v677 = vadd.f32 0.0, %v676
        %v678 = vpop.f32.mrb[0].mxu0
        %679 = vmatprep.mubr.f32.mxu0 0.0
        %680 = vmatmul.mubr.f32.gmra.mrb[0].mxu0 %v608
        %v681 = vpop.f32.mrb[0].mxu0
        %v682 = vadd.f32 0.0, %v681
        %v683 = vpop.f32.mrb[0].mxu0
        %684 = vdwg.mxu0
        %v685 = vsel %vm605, %v566, 0
        %v687 = vsel %vm605, %v571, 0
        %689 = vmatprep.subr.mxu0 0.0
        %690 = vmatpush1.msra.mxu0 %v579
        %691 = vmatprep.subr.mxu0 0.0
        %692 = vmatpush1.msra.mxu0 %v580
        %693 = vmatprep.subr.mxu0 0.0
        %694 = vmatpush1.msra.mxu0 %v581
        %695 = vmatprep.subr.mxu0 0.0
        %696 = vmatpush1.msra.mxu0 %v582
        %697 = vmatprep.subr.mxu0 0.0
        %698 = vmatpush1.msra.mxu0 %v583
        %699 = vmatprep.subr.mxu0 0.0
        %700 = vmatpush1.msra.mxu0 %v584
        %701 = vmatprep.subr.mxu0 0.0
        %702 = vmatpush1.msra.mxu0 %v585
        %703 = vmatprep.subr.mxu0 0.0
        %704 = vmatpush1.msra.mxu0 %v586
        %705 = vmatprep.subr.mxu0 0.0
        %706 = vmatpush1.msra.mxu0 0.0
        %707 = vmatprep.subr.mxu0 0.0
        %708 = vmatpush1.msra.mxu0 0.0
        %709 = vmatprep.subr.mxu0 0.0
        %710 = vmatpush1.msra.mxu0 0.0
        %711 = vmatprep.subr.mxu0 0.0
        %712 = vmatpush1.msra.mxu0 0.0
        %713 = vmatprep.subr.mxu0 0.0
        %714 = vmatpush1.msra.mxu0 0.0
        %715 = vmatprep.subr.mxu0 0.0
        %716 = vmatpush1.msra.mxu0 0.0
        %717 = vmatprep.subr.mxu0 0.0
        %718 = vmatpush1.msra.mxu0 0.0
        %719 = vmatprep.subr.mxu0 0.0
        %720 = vmatpush1.msra.mxu0 0.0
        %721 = vmatprep.subr.mxu0 0.0
        %722 = vmatpush1.msra.mxu0 0.0
        %723 = vmatprep.subr.mxu0 0.0
        %724 = vmatpush1.msra.mxu0 0.0
        %725 = vmatprep.subr.mxu0 0.0
        %726 = vmatpush1.msra.mxu0 0.0
        %727 = vmatprep.subr.mxu0 0.0
        %728 = vmatpush1.msra.mxu0 0.0
        %729 = vmatprep.subr.mxu0 0.0
        %730 = vmatpush1.msra.mxu0 0.0
        %731 = vmatprep.subr.mxu0 0.0
        %732 = vmatpush1.msra.mxu0 0.0
        %733 = vmatprep.subr.mxu0 0.0
        %734 = vmatpush1.msra.mxu0 0.0
        %735 = vmatprep.subr.mxu0 0.0
        %736 = vmatpush1.msra.mxu0 0.0
        %737 = vmatprep.subr.mxu0 0.0
        %738 = vmatpush1.msra.mxu0 0.0
        %739 = vmatprep.subr.mxu0 0.0
        %740 = vmatpush1.msra.mxu0 0.0
        %741 = vmatprep.subr.mxu0 0.0
        %742 = vmatpush1.msra.mxu0 0.0
        %743 = vmatprep.subr.mxu0 0.0
        %744 = vmatpush1.msra.mxu0 0.0
        %745 = vmatprep.subr.mxu0 0.0
        %746 = vmatpush1.msra.mxu0 0.0
        %747 = vmatprep.subr.mxu0 0.0
        %748 = vmatpush1.msra.mxu0 0.0
        %749 = vmatprep.subr.mxu0 0.0
        %750 = vmatpush1.msra.mxu0 0.0
        %751 = vmatprep.subr.mxu0 0.0
        %752 = vmatpush1.msra.mxu0 0.0
        %753 = vmatprep.mubr.f32.mxu0 0.0
        %754 = vmatmul.mubr.f32.gmra.mrb[0].mxu0 %v685
        %v755 = vpop.f32.mrb[0].mxu0
        %v756 = vadd.f32 %v677, %v755
        %v757 = vpop.f32.mrb[0].mxu0
        %758 = vmatprep.mubr.f32.mxu0 0.0
        %759 = vmatmul.mubr.f32.gmra.mrb[0].mxu0 %v687
        %v760 = vpop.f32.mrb[0].mxu0
        %v761 = vadd.f32 %v682, %v760
        %v762 = vpop.f32.mrb[0].mxu0
        %763 = vdwg.mxu0
        %s764 = scalar_lea.vmem %s1, 128
        %v765 = vld [vmem:[%s764] sm:$0xff]
        %v766 = vld [vmem:[%s764 + $0x8] sm:$0xff]
        %v767 = vld [vmem:[%s764 + $0x10] sm:$0xff]
        %v768 = vld [vmem:[%s764 + $0x18] sm:$0xff]
        %v769 = vld [vmem:[%s764 + $0x20] sm:$0xff]
        %v770 = vld [vmem:[%s764 + $0x28] sm:$0xff]
        %v771 = vld [vmem:[%s764 + $0x30] sm:$0xff]
        %v772 = vld [vmem:[%s764 + $0x38] sm:$0xff]
        %vm773 = vcmask 1045504
        %v774 = vrot.slane %v566, 2
        %v775 = vrot.slane %v571, 2
        %v776 = vsel %vm773, %v774, %v775
        %v777 = vrot.slane %v576, 2
        %v778 = vsel %vm773, %v775, %v777
        %v779 = vsel %vm605, %v776, 0
        %v781 = vsel %vm605, %v778, 0
        %783 = vmatprep.subr.mxu0 0.0
        %784 = vmatpush1.msra.mxu0 %v765
        %785 = vmatprep.subr.mxu0 0.0
        %786 = vmatpush1.msra.mxu0 %v766
        %787 = vmatprep.subr.mxu0 0.0
        %788 = vmatpush1.msra.mxu0 %v767
        %789 = vmatprep.subr.mxu0 0.0
        %790 = vmatpush1.msra.mxu0 %v768
        %791 = vmatprep.subr.mxu0 0.0
        %792 = vmatpush1.msra.mxu0 %v769
        %793 = vmatprep.subr.mxu0 0.0
        %794 = vmatpush1.msra.mxu0 %v770
        %795 = vmatprep.subr.mxu0 0.0
        %796 = vmatpush1.msra.mxu0 %v771
        %797 = vmatprep.subr.mxu0 0.0
        %798 = vmatpush1.msra.mxu0 %v772
        %799 = vmatprep.subr.mxu0 0.0
        %800 = vmatpush1.msra.mxu0 0.0
        %801 = vmatprep.subr.mxu0 0.0
        %802 = vmatpush1.msra.mxu0 0.0
        %803 = vmatprep.subr.mxu0 0.0
        %804 = vmatpush1.msra.mxu0 0.0
        %805 = vmatprep.subr.mxu0 0.0
        %806 = vmatpush1.msra.mxu0 0.0
        %807 = vmatprep.subr.mxu0 0.0
        %808 = vmatpush1.msra.mxu0 0.0
        %809 = vmatprep.subr.mxu0 0.0
        %810 = vmatpush1.msra.mxu0 0.0
        %811 = vmatprep.subr.mxu0 0.0
        %812 = vmatpush1.msra.mxu0 0.0
        %813 = vmatprep.subr.mxu0 0.0
        %814 = vmatpush1.msra.mxu0 0.0
        %815 = vmatprep.subr.mxu0 0.0
        %816 = vmatpush1.msra.mxu0 0.0
        %817 = vmatprep.subr.mxu0 0.0
        %818 = vmatpush1.msra.mxu0 0.0
        %819 = vmatprep.subr.mxu0 0.0
        %820 = vmatpush1.msra.mxu0 0.0
        %821 = vmatprep.subr.mxu0 0.0
        %822 = vmatpush1.msra.mxu0 0.0
        %823 = vmatprep.subr.mxu0 0.0
        %824 = vmatpush1.msra.mxu0 0.0
        %825 = vmatprep.subr.mxu0 0.0
        %826 = vmatpush1.msra.mxu0 0.0
        %827 = vmatprep.subr.mxu0 0.0
        %828 = vmatpush1.msra.mxu0 0.0
        %829 = vmatprep.subr.mxu0 0.0
        %830 = vmatpush1.msra.mxu0 0.0
        %831 = vmatprep.subr.mxu0 0.0
        %832 = vmatpush1.msra.mxu0 0.0
        %833 = vmatprep.subr.mxu0 0.0
        %834 = vmatpush1.msra.mxu0 0.0
        %835 = vmatprep.subr.mxu0 0.0
        %836 = vmatpush1.msra.mxu0 0.0
        %837 = vmatprep.subr.mxu0 0.0
        %838 = vmatpush1.msra.mxu0 0.0
        %839 = vmatprep.subr.mxu0 0.0
        %840 = vmatpush1.msra.mxu0 0.0
        %841 = vmatprep.subr.mxu0 0.0
        %842 = vmatpush1.msra.mxu0 0.0
        %843 = vmatprep.subr.mxu0 0.0
        %844 = vmatpush1.msra.mxu0 0.0
        %845 = vmatprep.subr.mxu0 0.0
        %846 = vmatpush1.msra.mxu0 0.0
        %847 = vmatprep.mubr.f32.mxu0 0.0
        %848 = vmatmul.mubr.f32.gmra.mrb[0].mxu0 %v779
        %v849 = vpop.f32.mrb[0].mxu0
        %v850 = vadd.f32 0.0, %v849
        %v851 = vpop.f32.mrb[0].mxu0
        %852 = vmatprep.mubr.f32.mxu0 0.0
        %853 = vmatmul.mubr.f32.gmra.mrb[0].mxu0 %v781
        %v854 = vpop.f32.mrb[0].mxu0
        %v855 = vadd.f32 0.0, %v854
        %v856 = vpop.f32.mrb[0].mxu0
        %857 = vdwg.mxu0
        %v858 = vadd.f32 %v756, %v850
        %v859 = vadd.f32 %v761, %v855
        %s860 = scalar_lea.vmem %s1, 192
        %v861 = vld [vmem:[%s860] sm:$0xff]
        %v862 = vld [vmem:[%s860 + $0x8] sm:$0xff]
        %v863 = vld [vmem:[%s860 + $0x10] sm:$0xff]
        %v864 = vld [vmem:[%s860 + $0x18] sm:$0xff]
        %v865 = vld [vmem:[%s860 + $0x20] sm:$0xff]
        %v866 = vld [vmem:[%s860 + $0x28] sm:$0xff]
        %v867 = vld [vmem:[%s860 + $0x30] sm:$0xff]
        %v868 = vld [vmem:[%s860 + $0x38] sm:$0xff]
        %vm869 = vcmask 1044480
        %v870 = vrot.slane %v566, 3
        %v871 = vrot.slane %v571, 3
        %v872 = vsel %vm869, %v870, %v871
        %v873 = vrot.slane %v576, 3
        %v874 = vsel %vm869, %v871, %v873
        %v875 = vsel %vm605, %v872, 0
        %v877 = vsel %vm605, %v874, 0
        %879 = vmatprep.subr.mxu0 0.0
        %880 = vmatpush1.msra.mxu0 %v861
        %881 = vmatprep.subr.mxu0 0.0
        %882 = vmatpush1.msra.mxu0 %v862
        %883 = vmatprep.subr.mxu0 0.0
        %884 = vmatpush1.msra.mxu0 %v863
        %885 = vmatprep.subr.mxu0 0.0
        %886 = vmatpush1.msra.mxu0 %v864
        %887 = vmatprep.subr.mxu0 0.0
        %888 = vmatpush1.msra.mxu0 %v865
        %889 = vmatprep.subr.mxu0 0.0
        %890 = vmatpush1.msra.mxu0 %v866
        %891 = vmatprep.subr.mxu0 0.0
        %892 = vmatpush1.msra.mxu0 %v867
        %893 = vmatprep.subr.mxu0 0.0
        %894 = vmatpush1.msra.mxu0 %v868
        %895 = vmatprep.subr.mxu0 0.0
        %896 = vmatpush1.msra.mxu0 0.0
        %897 = vmatprep.subr.mxu0 0.0
        %898 = vmatpush1.msra.mxu0 0.0
        %899 = vmatprep.subr.mxu0 0.0
        %900 = vmatpush1.msra.mxu0 0.0
        %901 = vmatprep.subr.mxu0 0.0
        %902 = vmatpush1.msra.mxu0 0.0
        %903 = vmatprep.subr.mxu0 0.0
        %904 = vmatpush1.msra.mxu0 0.0
        %905 = vmatprep.subr.mxu0 0.0
        %906 = vmatpush1.msra.mxu0 0.0
        %907 = vmatprep.subr.mxu0 0.0
        %908 = vmatpush1.msra.mxu0 0.0
        %909 = vmatprep.subr.mxu0 0.0
        %910 = vmatpush1.msra.mxu0 0.0
        %911 = vmatprep.subr.mxu0 0.0
        %912 = vmatpush1.msra.mxu0 0.0
        %913 = vmatprep.subr.mxu0 0.0
        %914 = vmatpush1.msra.mxu0 0.0
        %915 = vmatprep.subr.mxu0 0.0
        %916 = vmatpush1.msra.mxu0 0.0
        %917 = vmatprep.subr.mxu0 0.0
        %918 = vmatpush1.msra.mxu0 0.0
        %919 = vmatprep.subr.mxu0 0.0
        %920 = vmatpush1.msra.mxu0 0.0
        %921 = vmatprep.subr.mxu0 0.0
        %922 = vmatpush1.msra.mxu0 0.0
        %923 = vmatprep.subr.mxu0 0.0
        %924 = vmatpush1.msra.mxu0 0.0
        %925 = vmatprep.subr.mxu0 0.0
        %926 = vmatpush1.msra.mxu0 0.0
        %927 = vmatprep.subr.mxu0 0.0
        %928 = vmatpush1.msra.mxu0 0.0
        %929 = vmatprep.subr.mxu0 0.0
        %930 = vmatpush1.msra.mxu0 0.0
        %931 = vmatprep.subr.mxu0 0.0
        %932 = vmatpush1.msra.mxu0 0.0
        %933 = vmatprep.subr.mxu0 0.0
        %934 = vmatpush1.msra.mxu0 0.0
        %935 = vmatprep.subr.mxu0 0.0
        %936 = vmatpush1.msra.mxu0 0.0
        %937 = vmatprep.subr.mxu0 0.0
        %938 = vmatpush1.msra.mxu0 0.0
        %939 = vmatprep.subr.mxu0 0.0
        %940 = vmatpush1.msra.mxu0 0.0
        %941 = vmatprep.subr.mxu0 0.0
        %942 = vmatpush1.msra.mxu0 0.0
        %943 = vmatprep.mubr.f32.mxu0 0.0
        %944 = vmatmul.mubr.f32.gmra.mrb[0].mxu0 %v875
        %v945 = vpop.f32.mrb[0].mxu0
        %v946 = vadd.f32 0.0, %v945
        %v947 = vpop.f32.mrb[0].mxu0
        %948 = vmatprep.mubr.f32.mxu0 0.0
        %949 = vmatmul.mubr.f32.gmra.mrb[0].mxu0 %v877
        %v950 = vpop.f32.mrb[0].mxu0
        %v951 = vadd.f32 0.0, %v950
        %v952 = vpop.f32.mrb[0].mxu0
        %953 = vdwg.mxu0
        %v954 = vadd.f32 %v858, %v946
        %v955 = vadd.f32 %v859, %v951
        %s956 = scalar_lea.vmem %s1, 256
        %v957 = vld [vmem:[%s956] sm:$0xff]
        %v958 = vld [vmem:[%s956 + $0x8] sm:$0xff]
        %v959 = vld [vmem:[%s956 + $0x10] sm:$0xff]
        %v960 = vld [vmem:[%s956 + $0x18] sm:$0xff]
        %v961 = vld [vmem:[%s956 + $0x20] sm:$0xff]
        %v962 = vld [vmem:[%s956 + $0x28] sm:$0xff]
        %v963 = vld [vmem:[%s956 + $0x30] sm:$0xff]
        %v964 = vld [vmem:[%s956 + $0x38] sm:$0xff]
        %vm965 = vcmask 1043456
        %v966 = vrot.slane %v566, 4
        %v967 = vrot.slane %v571, 4
        %v968 = vsel %vm965, %v966, %v967
        %v969 = vrot.slane %v576, 4
        %v970 = vsel %vm965, %v967, %v969
        %v971 = vsel %vm605, %v968, 0
        %v973 = vsel %vm605, %v970, 0
        %975 = vmatprep.subr.mxu0 0.0
        %976 = vmatpush1.msra.mxu0 %v957
        %977 = vmatprep.subr.mxu0 0.0
        %978 = vmatpush1.msra.mxu0 %v958
        %979 = vmatprep.subr.mxu0 0.0
        %980 = vmatpush1.msra.mxu0 %v959
        %981 = vmatprep.subr.mxu0 0.0
        %982 = vmatpush1.msra.mxu0 %v960
        %983 = vmatprep.subr.mxu0 0.0
        %984 = vmatpush1.msra.mxu0 %v961
        %985 = vmatprep.subr.mxu0 0.0
        %986 = vmatpush1.msra.mxu0 %v962
        %987 = vmatprep.subr.mxu0 0.0
        %988 = vmatpush1.msra.mxu0 %v963
        %989 = vmatprep.subr.mxu0 0.0
        %990 = vmatpush1.msra.mxu0 %v964
        %991 = vmatprep.subr.mxu0 0.0
        %992 = vmatpush1.msra.mxu0 0.0
        %993 = vmatprep.subr.mxu0 0.0
        %994 = vmatpush1.msra.mxu0 0.0
        %995 = vmatprep.subr.mxu0 0.0
        %996 = vmatpush1.msra.mxu0 0.0
        %997 = vmatprep.subr.mxu0 0.0
        %998 = vmatpush1.msra.mxu0 0.0
        %999 = vmatprep.subr.mxu0 0.0
        %1000 = vmatpush1.msra.mxu0 0.0
        %1001 = vmatprep.subr.mxu0 0.0
        %1002 = vmatpush1.msra.mxu0 0.0
        %1003 = vmatprep.subr.mxu0 0.0
        %1004 = vmatpush1.msra.mxu0 0.0
        %1005 = vmatprep.subr.mxu0 0.0
        %1006 = vmatpush1.msra.mxu0 0.0
        %1007 = vmatprep.subr.mxu0 0.0
        %1008 = vmatpush1.msra.mxu0 0.0
        %1009 = vmatprep.subr.mxu0 0.0
        %1010 = vmatpush1.msra.mxu0 0.0
        %1011 = vmatprep.subr.mxu0 0.0
        %1012 = vmatpush1.msra.mxu0 0.0
        %1013 = vmatprep.subr.mxu0 0.0
        %1014 = vmatpush1.msra.mxu0 0.0
        %1015 = vmatprep.subr.mxu0 0.0
        %1016 = vmatpush1.msra.mxu0 0.0
        %1017 = vmatprep.subr.mxu0 0.0
        %1018 = vmatpush1.msra.mxu0 0.0
        %1019 = vmatprep.subr.mxu0 0.0
        %1020 = vmatpush1.msra.mxu0 0.0
        %1021 = vmatprep.subr.mxu0 0.0
        %1022 = vmatpush1.msra.mxu0 0.0
        %1023 = vmatprep.subr.mxu0 0.0
        %1024 = vmatpush1.msra.mxu0 0.0
        %1025 = vmatprep.subr.mxu0 0.0
        %1026 = vmatpush1.msra.mxu0 0.0
        %1027 = vmatprep.subr.mxu0 0.0
        %1028 = vmatpush1.msra.mxu0 0.0
        %1029 = vmatprep.subr.mxu0 0.0
        %1030 = vmatpush1.msra.mxu0 0.0
        %1031 = vmatprep.subr.mxu0 0.0
        %1032 = vmatpush1.msra.mxu0 0.0
        %1033 = vmatprep.subr.mxu0 0.0
        %1034 = vmatpush1.msra.mxu0 0.0
        %1035 = vmatprep.subr.mxu0 0.0
        %1036 = vmatpush1.msra.mxu0 0.0
        %1037 = vmatprep.subr.mxu0 0.0
        %1038 = vmatpush1.msra.mxu0 0.0
        %1039 = vmatprep.mubr.f32.mxu0 0.0
        %1040 = vmatmul.mubr.f32.gmra.mrb[0].mxu0 %v971
        %v1041 = vpop.f32.mrb[0].mxu0
        %v1042 = vadd.f32 0.0, %v1041
        %v1043 = vpop.f32.mrb[0].mxu0
        %1044 = vmatprep.mubr.f32.mxu0 0.0
        %1045 = vmatmul.mubr.f32.gmra.mrb[0].mxu0 %v973
        %v1046 = vpop.f32.mrb[0].mxu0
        %v1047 = vadd.f32 0.0, %v1046
        %v1048 = vpop.f32.mrb[0].mxu0
        %1049 = vdwg.mxu0
        %v1050 = vadd.f32 %v954, %v1042
        %v1051 = vadd.f32 %v955, %v1047
        %v1052 = vld [vmem:[#allocation2] sm:$0x7]
        %v1053 = vlaneseq
        %v1054 = vshrl.u32 %v1053, 7
        %v1055 = vsub.s32 0, %v1054
        %v1056 = vrot.slane %v1052, %v1055
        %v1057 = vadd.f32 %v1050, %v1056
        %v1058 = vadd.f32 %v1051, %v1056
        %v1059 = vmax.f32 %v1057, 0.0
        %v1060 = vmax.f32 %v1058, 0.0
        %v1061 = vlaneseq
        %v1062 = vshrl.u32 %v1061, 7
        %v1063 = vsub.s32 1, %v1062
        %v1064 = vrot.slane %v1052, %v1063
        %v1065 = vmul.f32 %v1059, %v1064
        %v1066 = vmul.f32 %v1060, %v1064
        %v1067 = vlaneseq
        %v1068 = vshrl.u32 %v1067, 7
        %v1069 = vsub.s32 2, %v1068
        %v1070 = vrot.slane %v1052, %v1069
        %v1071 = vadd.f32 %v1065, %v1070
        %v1072 = vadd.f32 %v1066, %v1070
        %v1073 = vld [vmem:[#allocation4] sm:$0xff]
        %v1074 = vld [vmem:[#allocation4 + $0x8] sm:$0xff]
        %v1075 = vld [vmem:[#allocation4 + $0x10] sm:$0xff]
        %v1076 = vld [vmem:[#allocation4 + $0x18] sm:$0xff]
        %v1077 = vld [vmem:[#allocation4 + $0x20] sm:$0xff]
        %v1078 = vld [vmem:[#allocation4 + $0x28] sm:$0xff]
        %v1079 = vld [vmem:[#allocation4 + $0x30] sm:$0xff]
        %v1080 = vld [vmem:[#allocation4 + $0x38] sm:$0xff]
        %v1082 = vsel %vm605, %v1071, 0
        %v1085 = vsel %vm605, %v1072, 0
        %1087 = vmatprep.subr.mxu0 0.0
        %1088 = vmatpush1.msra.mxu0 %v1073
        %1089 = vmatprep.subr.mxu0 0.0
        %1090 = vmatpush1.msra.mxu0 %v1074
        %1091 = vmatprep.subr.mxu0 0.0
        %1092 = vmatpush1.msra.mxu0 %v1075
        %1093 = vmatprep.subr.mxu0 0.0
        %1094 = vmatpush1.msra.mxu0 %v1076
        %1095 = vmatprep.subr.mxu0 0.0
        %1096 = vmatpush1.msra.mxu0 %v1077
        %1097 = vmatprep.subr.mxu0 0.0
        %1098 = vmatpush1.msra.mxu0 %v1078
        %1099 = vmatprep.subr.mxu0 0.0
        %1100 = vmatpush1.msra.mxu0 %v1079
        %1101 = vmatprep.subr.mxu0 0.0
        %1102 = vmatpush1.msra.mxu0 %v1080
        %1103 = vmatprep.subr.mxu0 0.0
        %1104 = vmatpush1.msra.mxu0 0.0
        %1105 = vmatprep.subr.mxu0 0.0
        %1106 = vmatpush1.msra.mxu0 0.0
        %1107 = vmatprep.subr.mxu0 0.0
        %1108 = vmatpush1.msra.mxu0 0.0
        %1109 = vmatprep.subr.mxu0 0.0
        %1110 = vmatpush1.msra.mxu0 0.0
        %1111 = vmatprep.subr.mxu0 0.0
        %1112 = vmatpush1.msra.mxu0 0.0
        %1113 = vmatprep.subr.mxu0 0.0
        %1114 = vmatpush1.msra.mxu0 0.0
        %1115 = vmatprep.subr.mxu0 0.0
        %1116 = vmatpush1.msra.mxu0 0.0
        %1117 = vmatprep.subr.mxu0 0.0
        %1118 = vmatpush1.msra.mxu0 0.0
        %1119 = vmatprep.subr.mxu0 0.0
        %1120 = vmatpush1.msra.mxu0 0.0
        %1121 = vmatprep.subr.mxu0 0.0
        %1122 = vmatpush1.msra.mxu0 0.0
        %1123 = vmatprep.subr.mxu0 0.0
        %1124 = vmatpush1.msra.mxu0 0.0
        %1125 = vmatprep.subr.mxu0 0.0
        %1126 = vmatpush1.msra.mxu0 0.0
        %1127 = vmatprep.subr.mxu0 0.0
        %1128 = vmatpush1.msra.mxu0 0.0
        %1129 = vmatprep.subr.mxu0 0.0
        %1130 = vmatpush1.msra.mxu0 0.0
        %1131 = vmatprep.subr.mxu0 0.0
        %1132 = vmatpush1.msra.mxu0 0.0
        %1133 = vmatprep.subr.mxu0 0.0
        %1134 = vmatpush1.msra.mxu0 0.0
        %1135 = vmatprep.subr.mxu0 0.0
        %1136 = vmatpush1.msra.mxu0 0.0
        %1137 = vmatprep.subr.mxu0 0.0
        %1138 = vmatpush1.msra.mxu0 0.0
        %1139 = vmatprep.subr.mxu0 0.0
        %1140 = vmatpush1.msra.mxu0 0.0
        %1141 = vmatprep.subr.mxu0 0.0
        %1142 = vmatpush1.msra.mxu0 0.0
        %1143 = vmatprep.subr.mxu0 0.0
        %1144 = vmatpush1.msra.mxu0 0.0
        %1145 = vmatprep.subr.mxu0 0.0
        %1146 = vmatpush1.msra.mxu0 0.0
        %1147 = vmatprep.subr.mxu0 0.0
        %1148 = vmatpush1.msra.mxu0 0.0
        %1149 = vmatprep.subr.mxu0 0.0
        %1150 = vmatpush1.msra.mxu0 0.0
        %1151 = vmatprep.mubr.f32.mxu0 0.0
        %1152 = vmatmul.mubr.f32.gmra.mrb[0].mxu0 %v1082
        %v1153 = vpop.f32.mrb[0].mxu0
        %v1154 = vadd.f32 0.0, %v1153
        %v1155 = vpop.f32.mrb[0].mxu0
        %1156 = vmatprep.mubr.f32.mxu0 0.0
        %1157 = vmatmul.mubr.f32.gmra.mrb[0].mxu0 %v1085
        %v1158 = vpop.f32.mrb[0].mxu0
        %v1159 = vadd.f32 0.0, %v1158
        %v1160 = vpop.f32.mrb[0].mxu0
        %1161 = vdwg.mxu0
        %v1162 = vld [vmem:[#allocation6] sm:$0xff]
        %v1163 = vld [vmem:[#allocation6 + $0x8] sm:$0xff]
        %v1165 = vsel %vm489, %v1162, 0
        %v1168 = vsel %vm489, %v1163, 0
        %1170 = vmatprep.subr.mxu0 0.0
        %1171 = vmatpush1.msra.mxu0 %v1154
        %1172 = vmatprep.subr.mxu0 0.0
        %1173 = vmatpush1.msra.mxu0 %v1159
        %1174 = vmatprep.subr.mxu0 0.0
        %1175 = vmatpush1.msra.mxu0 0.0
        %1176 = vmatprep.subr.mxu0 0.0
        %1177 = vmatpush1.msra.mxu0 0.0
        %1178 = vmatprep.subr.mxu0 0.0
        %1179 = vmatpush1.msra.mxu0 0.0
        %1180 = vmatprep.subr.mxu0 0.0
        %1181 = vmatpush1.msra.mxu0 0.0
        %1182 = vmatprep.subr.mxu0 0.0
        %1183 = vmatpush1.msra.mxu0 0.0
        %1184 = vmatprep.subr.mxu0 0.0
        %1185 = vmatpush1.msra.mxu0 0.0
        %1186 = vmatprep.subr.mxu0 0.0
        %1187 = vmatpush1.msra.mxu0 0.0
        %1188 = vmatprep.subr.mxu0 0.0
        %1189 = vmatpush1.msra.mxu0 0.0
        %1190 = vmatprep.subr.mxu0 0.0
        %1191 = vmatpush1.msra.mxu0 0.0
        %1192 = vmatprep.subr.mxu0 0.0
        %1193 = vmatpush1.msra.mxu0 0.0
        %1194 = vmatprep.subr.mxu0 0.0
        %1195 = vmatpush1.msra.mxu0 0.0
        %1196 = vmatprep.subr.mxu0 0.0
        %1197 = vmatpush1.msra.mxu0 0.0
        %1198 = vmatprep.subr.mxu0 0.0
        %1199 = vmatpush1.msra.mxu0 0.0
        %1200 = vmatprep.subr.mxu0 0.0
        %1201 = vmatpush1.msra.mxu0 0.0
        %1202 = vmatprep.subr.mxu0 0.0
        %1203 = vmatpush1.msra.mxu0 0.0
        %1204 = vmatprep.subr.mxu0 0.0
        %1205 = vmatpush1.msra.mxu0 0.0
        %1206 = vmatprep.subr.mxu0 0.0
        %1207 = vmatpush1.msra.mxu0 0.0
        %1208 = vmatprep.subr.mxu0 0.0
        %1209 = vmatpush1.msra.mxu0 0.0
        %1210 = vmatprep.subr.mxu0 0.0
        %1211 = vmatpush1.msra.mxu0 0.0
        %1212 = vmatprep.subr.mxu0 0.0
        %1213 = vmatpush1.msra.mxu0 0.0
        %1214 = vmatprep.subr.mxu0 0.0
        %1215 = vmatpush1.msra.mxu0 0.0
        %1216 = vmatprep.subr.mxu0 0.0
        %1217 = vmatpush1.msra.mxu0 0.0
        %1218 = vmatprep.subr.mxu0 0.0
        %1219 = vmatpush1.msra.mxu0 0.0
        %1220 = vmatprep.subr.mxu0 0.0
        %1221 = vmatpush1.msra.mxu0 0.0
        %1222 = vmatprep.subr.mxu0 0.0
        %1223 = vmatpush1.msra.mxu0 0.0
        %1224 = vmatprep.subr.mxu0 0.0
        %1225 = vmatpush1.msra.mxu0 0.0
        %1226 = vmatprep.subr.mxu0 0.0
        %1227 = vmatpush1.msra.mxu0 0.0
        %1228 = vmatprep.subr.mxu0 0.0
        %1229 = vmatpush1.msra.mxu0 0.0
        %1230 = vmatprep.subr.mxu0 0.0
        %1231 = vmatpush1.msra.mxu0 0.0
        %1232 = vmatprep.subr.mxu0 0.0
        %1233 = vmatpush1.msra.mxu0 0.0
        %1234 = vmatprep.mubr.f32.mxu0 0.0
        %1235 = vmatmul.mubr.f32.gmra.mrb[0].mxu0 %v1165
        %v1236 = vpop.f32.mrb[0].mxu0
        %v1237 = vadd.f32 0.0, %v1236
        %v1238 = vpop.f32.mrb[0].mxu0
        %1239 = vmatprep.mubr.f32.mxu0 0.0
        %1240 = vmatmul.mubr.f32.gmra.mrb[0].mxu0 %v1168
        %v1241 = vpop.f32.mrb[0].mxu0
        %v1242 = vadd.f32 0.0, %v1241
        %v1243 = vpop.f32.mrb[0].mxu0
        %1244 = vdwg.mxu0
        %v1245 = vadd.s32 %v478, 1
        %vm1246 = vcmp.eq.s32.totalorder %v474, %v1245
        %vm1247 = vcmp.eq.s32.totalorder %v475, %v1245
        %v1248 = vsel %vm1246, 1, 0
        %v1249 = vsel %vm1247, 1, 0
        %v1250 = vcvt.s32.f32 %v1248
        %v1251 = vcvt.s32.f32 %v1249
        %vm1252 = vcmask 64512
        %v1254 = vsel %vm1252, %v1250, 0
        %v1257 = vsel %vm1252, %v1251, 0
        %1259 = vmatprep.subr.mxu0 0.0
        %1260 = vmatpush1.msra.mxu0 %v1237
        %1261 = vmatprep.subr.mxu0 0.0
        %1262 = vmatpush1.msra.mxu0 0.0
        %1263 = vmatprep.subr.mxu0 0.0
        %1264 = vmatpush1.msra.mxu0 0.0
        %1265 = vmatprep.subr.mxu0 0.0
        %1266 = vmatpush1.msra.mxu0 0.0
        %1267 = vmatprep.subr.mxu0 0.0
        %1268 = vmatpush1.msra.mxu0 0.0
        %1269 = vmatprep.subr.mxu0 0.0
        %1270 = vmatpush1.msra.mxu0 0.0
        %1271 = vmatprep.subr.mxu0 0.0
        %1272 = vmatpush1.msra.mxu0 0.0
        %1273 = vmatprep.subr.mxu0 0.0
        %1274 = vmatpush1.msra.mxu0 0.0
        %1275 = vmatprep.subr.mxu0 0.0
        %1276 = vmatpush1.msra.mxu0 0.0
        %1277 = vmatprep.subr.mxu0 0.0
        %1278 = vmatpush1.msra.mxu0 0.0
        %1279 = vmatprep.subr.mxu0 0.0
        %1280 = vmatpush1.msra.mxu0 0.0
        %1281 = vmatprep.subr.mxu0 0.0
        %1282 = vmatpush1.msra.mxu0 0.0
        %1283 = vmatprep.subr.mxu0 0.0
        %1284 = vmatpush1.msra.mxu0 0.0
        %1285 = vmatprep.subr.mxu0 0.0
        %1286 = vmatpush1.msra.mxu0 0.0
        %1287 = vmatprep.subr.mxu0 0.0
        %1288 = vmatpush1.msra.mxu0 0.0
        %1289 = vmatprep.subr.mxu0 0.0
        %1290 = vmatpush1.msra.mxu0 0.0
        %1291 = vmatprep.subr.mxu0 0.0
        %1292 = vmatpush1.msra.mxu0 0.0
        %1293 = vmatprep.subr.mxu0 0.0
        %1294 = vmatpush1.msra.mxu0 0.0
        %1295 = vmatprep.subr.mxu0 0.0
        %1296 = vmatpush1.msra.mxu0 0.0
        %1297 = vmatprep.subr.mxu0 0.0
        %1298 = vmatpush1.msra.mxu0 0.0
        %1299 = vmatprep.subr.mxu0 0.0
        %1300 = vmatpush1.msra.mxu0 0.0
        %1301 = vmatprep.subr.mxu0 0.0
        %1302 = vmatpush1.msra.mxu0 0.0
        %1303 = vmatprep.subr.mxu0 0.0
        %1304 = vmatpush1.msra.mxu0 0.0
        %1305 = vmatprep.subr.mxu0 0.0
        %1306 = vmatpush1.msra.mxu0 0.0
        %1307 = vmatprep.subr.mxu0 0.0
        %1308 = vmatpush1.msra.mxu0 0.0
        %1309 = vmatprep.subr.mxu0 0.0
        %1310 = vmatpush1.msra.mxu0 0.0
        %1311 = vmatprep.subr.mxu0 0.0
        %1312 = vmatpush1.msra.mxu0 0.0
        %1313 = vmatprep.subr.mxu0 0.0
        %1314 = vmatpush1.msra.mxu0 0.0
        %1315 = vmatprep.subr.mxu0 0.0
        %1316 = vmatpush1.msra.mxu0 0.0
        %1317 = vmatprep.subr.mxu0 0.0
        %1318 = vmatpush1.msra.mxu0 0.0
        %1319 = vmatprep.subr.mxu0 0.0
        %1320 = vmatpush1.msra.mxu0 0.0
        %1321 = vmatprep.subr.mxu0 0.0
        %1322 = vmatpush1.msra.mxu0 0.0
        %1323 = vmatprep.mubr.f32.mxu0 0.0
        %1324 = vmatmul.mubr.f32.gmra.mrb[0].mxu0 %v1254
        %v1325 = vpop.f32.mrb[0].mxu0
        %v1326 = vadd.f32 0.0, %v1325
        %v1327 = vpop.f32.mrb[0].mxu0
        %1328 = vmatprep.mubr.f32.mxu0 0.0
        %1329 = vmatmul.mubr.f32.gmra.mrb[0].mxu0 %v1257
        %v1330 = vpop.f32.mrb[0].mxu0
        %v1331 = vadd.f32 0.0, %v1330
        %v1332 = vpop.f32.mrb[0].mxu0
        %1333 = vdwg.mxu0
        %v1334 = vld [vmem:[#allocation7] sm:$0xff]
        %v1335 = vld [vmem:[#allocation7 + $0x8] sm:$0xff]
        %v1336 = vld [vmem:[#allocation7 + $0x10] sm:$0xff]
        %v1337 = vld [vmem:[#allocation7 + $0x18] sm:$0xff]
        %s1338 = scalar_lea.vmem [#allocation7], 32
        %v1339 = vld [vmem:[%s1338] sm:$0xff]
        %v1340 = vld [vmem:[%s1338 + $0x8] sm:$0xff]
        %v1341 = vld [vmem:[%s1338 + $0x10] sm:$0xff]
        %v1342 = vld [vmem:[%s1338 + $0x18] sm:$0xff]
        %v1345 = vrot.slane %v1326, 1
        %v1346 = vrot.slane %v1331, 1
        %v1347 = vsel %vm599, %v1345, %v1346
        %vm1348 = vcmask 261120
        %v1349 = vsel %vm1348, %v1347, 0
        %1351 = vmatprep.subr.mxu0 0.0
        %1352 = vmatpush1.msra.mxu0 %v1339
        %1353 = vmatprep.subr.mxu0 0.0
        %1354 = vmatpush1.msra.mxu0 %v1340
        %1355 = vmatprep.subr.mxu0 0.0
        %1356 = vmatpush1.msra.mxu0 %v1341
        %1357 = vmatprep.subr.mxu0 0.0
        %1358 = vmatpush1.msra.mxu0 %v1342
        %1359 = vmatprep.subr.mxu0 0.0
        %1360 = vmatpush1.msra.mxu0 0.0
        %1361 = vmatprep.subr.mxu0 0.0
        %1362 = vmatpush1.msra.mxu0 0.0
        %1363 = vmatprep.subr.mxu0 0.0
        %1364 = vmatpush1.msra.mxu0 0.0
        %1365 = vmatprep.subr.mxu0 0.0
        %1366 = vmatpush1.msra.mxu0 0.0
        %1367 = vmatprep.subr.mxu0 0.0
        %1368 = vmatpush1.msra.mxu0 0.0
        %1369 = vmatprep.subr.mxu0 0.0
        %1370 = vmatpush1.msra.mxu0 0.0
        %1371 = vmatprep.subr.mxu0 0.0
        %1372 = vmatpush1.msra.mxu0 0.0
        %1373 = vmatprep.subr.mxu0 0.0
        %1374 = vmatpush1.msra.mxu0 0.0
        %1375 = vmatprep.subr.mxu0 0.0
        %1376 = vmatpush1.msra.mxu0 0.0
        %1377 = vmatprep.subr.mxu0 0.0
        %1378 = vmatpush1.msra.mxu0 0.0
        %1379 = vmatprep.subr.mxu0 0.0
        %1380 = vmatpush1.msra.mxu0 0.0
        %1381 = vmatprep.subr.mxu0 0.0
        %1382 = vmatpush1.msra.mxu0 0.0
        %1383 = vmatprep.subr.mxu0 0.0
        %1384 = vmatpush1.msra.mxu0 0.0
        %1385 = vmatprep.subr.mxu0 0.0
        %1386 = vmatpush1.msra.mxu0 0.0
        %1387 = vmatprep.subr.mxu0 0.0
        %1388 = vmatpush1.msra.mxu0 0.0
        %1389 = vmatprep.subr.mxu0 0.0
        %1390 = vmatpush1.msra.mxu0 0.0
        %1391 = vmatprep.subr.mxu0 0.0
        %1392 = vmatpush1.msra.mxu0 0.0
        %1393 = vmatprep.subr.mxu0 0.0
        %1394 = vmatpush1.msra.mxu0 0.0
        %1395 = vmatprep.subr.mxu0 0.0
        %1396 = vmatpush1.msra.mxu0 0.0
        %1397 = vmatprep.subr.mxu0 0.0
        %1398 = vmatpush1.msra.mxu0 0.0
        %1399 = vmatprep.subr.mxu0 0.0
        %1400 = vmatpush1.msra.mxu0 0.0
        %1401 = vmatprep.subr.mxu0 0.0
        %1402 = vmatpush1.msra.mxu0 0.0
        %1403 = vmatprep.subr.mxu0 0.0
        %1404 = vmatpush1.msra.mxu0 0.0
        %1405 = vmatprep.subr.mxu0 0.0
        %1406 = vmatpush1.msra.mxu0 0.0
        %1407 = vmatprep.subr.mxu0 0.0
        %1408 = vmatpush1.msra.mxu0 0.0
        %1409 = vmatprep.subr.mxu0 0.0
        %1410 = vmatpush1.msra.mxu0 0.0
        %1411 = vmatprep.subr.mxu0 0.0
        %1412 = vmatpush1.msra.mxu0 0.0
        %1413 = vmatprep.subr.mxu0 0.0
        %1414 = vmatpush1.msra.mxu0 0.0
        %1415 = vmatprep.mubr.f32.mxu0 0.0
        %1416 = vmatmul.mubr.f32.gmra.mrb[0].mxu0 %v1349
        %v1417 = vpop.f32.mrb[0].mxu0
        %v1418 = vadd.f32 0.0, %v1417
        %v1419 = vpop.f32.mrb[0].mxu0
        %1420 = vdwg.mxu0
        %v1421 = vsel %vm1348, %v1326, 0
        %1423 = vmatprep.subr.mxu0 0.0
        %1424 = vmatpush1.msra.mxu0 %v1334
        %1425 = vmatprep.subr.mxu0 0.0
        %1426 = vmatpush1.msra.mxu0 %v1335
        %1427 = vmatprep.subr.mxu0 0.0
        %1428 = vmatpush1.msra.mxu0 %v1336
        %1429 = vmatprep.subr.mxu0 0.0
        %1430 = vmatpush1.msra.mxu0 %v1337
        %1431 = vmatprep.subr.mxu0 0.0
        %1432 = vmatpush1.msra.mxu0 0.0
        %1433 = vmatprep.subr.mxu0 0.0
        %1434 = vmatpush1.msra.mxu0 0.0
        %1435 = vmatprep.subr.mxu0 0.0
        %1436 = vmatpush1.msra.mxu0 0.0
        %1437 = vmatprep.subr.mxu0 0.0
        %1438 = vmatpush1.msra.mxu0 0.0
        %1439 = vmatprep.subr.mxu0 0.0
        %1440 = vmatpush1.msra.mxu0 0.0
        %1441 = vmatprep.subr.mxu0 0.0
        %1442 = vmatpush1.msra.mxu0 0.0
        %1443 = vmatprep.subr.mxu0 0.0
        %1444 = vmatpush1.msra.mxu0 0.0
        %1445 = vmatprep.subr.mxu0 0.0
        %1446 = vmatpush1.msra.mxu0 0.0
        %1447 = vmatprep.subr.mxu0 0.0
        %1448 = vmatpush1.msra.mxu0 0.0
        %1449 = vmatprep.subr.mxu0 0.0
        %1450 = vmatpush1.msra.mxu0 0.0
        %1451 = vmatprep.subr.mxu0 0.0
        %1452 = vmatpush1.msra.mxu0 0.0
        %1453 = vmatprep.subr.mxu0 0.0
        %1454 = vmatpush1.msra.mxu0 0.0
        %1455 = vmatprep.subr.mxu0 0.0
        %1456 = vmatpush1.msra.mxu0 0.0
        %1457 = vmatprep.subr.mxu0 0.0
        %1458 = vmatpush1.msra.mxu0 0.0
        %1459 = vmatprep.subr.mxu0 0.0
        %1460 = vmatpush1.msra.mxu0 0.0
        %1461 = vmatprep.subr.mxu0 0.0
        %1462 = vmatpush1.msra.mxu0 0.0
        %1463 = vmatprep.subr.mxu0 0.0
        %1464 = vmatpush1.msra.mxu0 0.0
        %1465 = vmatprep.subr.mxu0 0.0
        %1466 = vmatpush1.msra.mxu0 0.0
        %1467 = vmatprep.subr.mxu0 0.0
        %1468 = vmatpush1.msra.mxu0 0.0
        %1469 = vmatprep.subr.mxu0 0.0
        %1470 = vmatpush1.msra.mxu0 0.0
        %1471 = vmatprep.subr.mxu0 0.0
        %1472 = vmatpush1.msra.mxu0 0.0
        %1473 = vmatprep.subr.mxu0 0.0
        %1474 = vmatpush1.msra.mxu0 0.0
        %1475 = vmatprep.subr.mxu0 0.0
        %1476 = vmatpush1.msra.mxu0 0.0
        %1477 = vmatprep.subr.mxu0 0.0
        %1478 = vmatpush1.msra.mxu0 0.0
        %1479 = vmatprep.subr.mxu0 0.0
        %1480 = vmatpush1.msra.mxu0 0.0
        %1481 = vmatprep.subr.mxu0 0.0
        %1482 = vmatpush1.msra.mxu0 0.0
        %1483 = vmatprep.subr.mxu0 0.0
        %1484 = vmatpush1.msra.mxu0 0.0
        %1485 = vmatprep.subr.mxu0 0.0
        %1486 = vmatpush1.msra.mxu0 0.0
        %1487 = vmatprep.mubr.f32.mxu0 0.0
        %1488 = vmatmul.mubr.f32.gmra.mrb[0].mxu0 %v1421
        %v1489 = vpop.f32.mrb[0].mxu0
        %v1490 = vadd.f32 %v1418, %v1489
        %v1491 = vpop.f32.mrb[0].mxu0
        %1492 = vdwg.mxu0
        %s1493 = scalar_lea.vmem [#allocation7], 64
        %v1494 = vld [vmem:[%s1493] sm:$0xff]
        %v1495 = vld [vmem:[%s1493 + $0x8] sm:$0xff]
        %v1496 = vld [vmem:[%s1493 + $0x10] sm:$0xff]
        %v1497 = vld [vmem:[%s1493 + $0x18] sm:$0xff]
        %v1498 = vrot.slane %v1326, 2
        %v1499 = vrot.slane %v1331, 2
        %v1500 = vsel %vm773, %v1498, %v1499
        %v1501 = vsel %vm1348, %v1500, 0
        %1503 = vmatprep.subr.mxu0 0.0
        %1504 = vmatpush1.msra.mxu0 %v1494
        %1505 = vmatprep.subr.mxu0 0.0
        %1506 = vmatpush1.msra.mxu0 %v1495
        %1507 = vmatprep.subr.mxu0 0.0
        %1508 = vmatpush1.msra.mxu0 %v1496
        %1509 = vmatprep.subr.mxu0 0.0
        %1510 = vmatpush1.msra.mxu0 %v1497
        %1511 = vmatprep.subr.mxu0 0.0
        %1512 = vmatpush1.msra.mxu0 0.0
        %1513 = vmatprep.subr.mxu0 0.0
        %1514 = vmatpush1.msra.mxu0 0.0
        %1515 = vmatprep.subr.mxu0 0.0
        %1516 = vmatpush1.msra.mxu0 0.0
        %1517 = vmatprep.subr.mxu0 0.0
        %1518 = vmatpush1.msra.mxu0 0.0
        %1519 = vmatprep.subr.mxu0 0.0
        %1520 = vmatpush1.msra.mxu0 0.0
        %1521 = vmatprep.subr.mxu0 0.0
        %1522 = vmatpush1.msra.mxu0 0.0
        %1523 = vmatprep.subr.mxu0 0.0
        %1524 = vmatpush1.msra.mxu0 0.0
        %1525 = vmatprep.subr.mxu0 0.0
        %1526 = vmatpush1.msra.mxu0 0.0
        %1527 = vmatprep.subr.mxu0 0.0
        %1528 = vmatpush1.msra.mxu0 0.0
        %1529 = vmatprep.subr.mxu0 0.0
        %1530 = vmatpush1.msra.mxu0 0.0
        %1531 = vmatprep.subr.mxu0 0.0
        %1532 = vmatpush1.msra.mxu0 0.0
        %1533 = vmatprep.subr.mxu0 0.0
        %1534 = vmatpush1.msra.mxu0 0.0
        %1535 = vmatprep.subr.mxu0 0.0
        %1536 = vmatpush1.msra.mxu0 0.0
        %1537 = vmatprep.subr.mxu0 0.0
        %1538 = vmatpush1.msra.mxu0 0.0
        %1539 = vmatprep.subr.mxu0 0.0
        %1540 = vmatpush1.msra.mxu0 0.0
        %1541 = vmatprep.subr.mxu0 0.0
        %1542 = vmatpush1.msra.mxu0 0.0
        %1543 = vmatprep.subr.mxu0 0.0
        %1544 = vmatpush1.msra.mxu0 0.0
        %1545 = vmatprep.subr.mxu0 0.0
        %1546 = vmatpush1.msra.mxu0 0.0
        %1547 = vmatprep.subr.mxu0 0.0
        %1548 = vmatpush1.msra.mxu0 0.0
        %1549 = vmatprep.subr.mxu0 0.0
        %1550 = vmatpush1.msra.mxu0 0.0
        %1551 = vmatprep.subr.mxu0 0.0
        %1552 = vmatpush1.msra.mxu0 0.0
        %1553 = vmatprep.subr.mxu0 0.0
        %1554 = vmatpush1.msra.mxu0 0.0
        %1555 = vmatprep.subr.mxu0 0.0
        %1556 = vmatpush1.msra.mxu0 0.0
        %1557 = vmatprep.subr.mxu0 0.0
        %1558 = vmatpush1.msra.mxu0 0.0
        %1559 = vmatprep.subr.mxu0 0.0
        %1560 = vmatpush1.msra.mxu0 0.0
        %1561 = vmatprep.subr.mxu0 0.0
        %1562 = vmatpush1.msra.mxu0 0.0
        %1563 = vmatprep.subr.mxu0 0.0
        %1564 = vmatpush1.msra.mxu0 0.0
        %1565 = vmatprep.subr.mxu0 0.0
        %1566 = vmatpush1.msra.mxu0 0.0
        %1567 = vmatprep.mubr.f32.mxu0 0.0
        %1568 = vmatmul.mubr.f32.gmra.mrb[0].mxu0 %v1501
        %v1569 = vpop.f32.mrb[0].mxu0
        %v1570 = vadd.f32 0.0, %v1569
        %v1571 = vpop.f32.mrb[0].mxu0
        %1572 = vdwg.mxu0
        %v1573 = vadd.f32 %v1490, %v1570
        %v1574 = vsel %vm1252, %v486, 0
        %v1576 = vsel %vm1252, %v487, 0
        %1578 = vmatprep.subr.mxu0 0.0
        %1579 = vmatpush1.msra.mxu0 %v1242
        %1580 = vmatprep.subr.mxu0 0.0
        %1581 = vmatpush1.msra.mxu0 0.0
        %1582 = vmatprep.subr.mxu0 0.0
        %1583 = vmatpush1.msra.mxu0 0.0
        %1584 = vmatprep.subr.mxu0 0.0
        %1585 = vmatpush1.msra.mxu0 0.0
        %1586 = vmatprep.subr.mxu0 0.0
        %1587 = vmatpush1.msra.mxu0 0.0
        %1588 = vmatprep.subr.mxu0 0.0
        %1589 = vmatpush1.msra.mxu0 0.0
        %1590 = vmatprep.subr.mxu0 0.0
        %1591 = vmatpush1.msra.mxu0 0.0
        %1592 = vmatprep.subr.mxu0 0.0
        %1593 = vmatpush1.msra.mxu0 0.0
        %1594 = vmatprep.subr.mxu0 0.0
        %1595 = vmatpush1.msra.mxu0 0.0
        %1596 = vmatprep.subr.mxu0 0.0
        %1597 = vmatpush1.msra.mxu0 0.0
        %1598 = vmatprep.subr.mxu0 0.0
        %1599 = vmatpush1.msra.mxu0 0.0
        %1600 = vmatprep.subr.mxu0 0.0
        %1601 = vmatpush1.msra.mxu0 0.0
        %1602 = vmatprep.subr.mxu0 0.0
        %1603 = vmatpush1.msra.mxu0 0.0
        %1604 = vmatprep.subr.mxu0 0.0
        %1605 = vmatpush1.msra.mxu0 0.0
        %1606 = vmatprep.subr.mxu0 0.0
        %1607 = vmatpush1.msra.mxu0 0.0
        %1608 = vmatprep.subr.mxu0 0.0
        %1609 = vmatpush1.msra.mxu0 0.0
        %1610 = vmatprep.subr.mxu0 0.0
        %1611 = vmatpush1.msra.mxu0 0.0
        %1612 = vmatprep.subr.mxu0 0.0
        %1613 = vmatpush1.msra.mxu0 0.0
        %1614 = vmatprep.subr.mxu0 0.0
        %1615 = vmatpush1.msra.mxu0 0.0
        %1616 = vmatprep.subr.mxu0 0.0
        %1617 = vmatpush1.msra.mxu0 0.0
        %1618 = vmatprep.subr.mxu0 0.0
        %1619 = vmatpush1.msra.mxu0 0.0
        %1620 = vmatprep.subr.mxu0 0.0
        %1621 = vmatpush1.msra.mxu0 0.0
        %1622 = vmatprep.subr.mxu0 0.0
        %1623 = vmatpush1.msra.mxu0 0.0
        %1624 = vmatprep.subr.mxu0 0.0
        %1625 = vmatpush1.msra.mxu0 0.0
        %1626 = vmatprep.subr.mxu0 0.0
        %1627 = vmatpush1.msra.mxu0 0.0
        %1628 = vmatprep.subr.mxu0 0.0
        %1629 = vmatpush1.msra.mxu0 0.0
        %1630 = vmatprep.subr.mxu0 0.0
        %1631 = vmatpush1.msra.mxu0 0.0
        %1632 = vmatprep.subr.mxu0 0.0
        %1633 = vmatpush1.msra.mxu0 0.0
        %1634 = vmatprep.subr.mxu0 0.0
        %1635 = vmatpush1.msra.mxu0 0.0
        %1636 = vmatprep.subr.mxu0 0.0
        %1637 = vmatpush1.msra.mxu0 0.0
        %1638 = vmatprep.subr.mxu0 0.0
        %1639 = vmatpush1.msra.mxu0 0.0
        %1640 = vmatprep.subr.mxu0 0.0
        %1641 = vmatpush1.msra.mxu0 0.0
        %1642 = vmatprep.mubr.f32.mxu0 0.0
        %1643 = vmatmul.mubr.f32.gmra.mrb[0].mxu0 %v1574
        %v1644 = vpop.f32.mrb[0].mxu0
        %v1645 = vadd.f32 0.0, %v1644
        %v1646 = vpop.f32.mrb[0].mxu0
        %1647 = vmatprep.mubr.f32.mxu0 0.0
        %1648 = vmatmul.mubr.f32.gmra.mrb[0].mxu0 %v1576
        %v1649 = vpop.f32.mrb[0].mxu0
        %v1650 = vadd.f32 0.0, %v1649
        %v1651 = vpop.f32.mrb[0].mxu0
        %1652 = vdwg.mxu0
        %v1653 = vld [vmem:[#allocation9] sm:$0xff]
        %v1654 = vld [vmem:[#allocation9 + $0x8] sm:$0xff]
        %v1655 = vld [vmem:[#allocation9 + $0x10] sm:$0xff]
        %v1656 = vld [vmem:[#allocation9 + $0x18] sm:$0xff]
        %s1657 = scalar_lea.vmem [#allocation9], 32
        %v1658 = vld [vmem:[%s1657] sm:$0xff]
        %v1659 = vld [vmem:[%s1657 + $0x8] sm:$0xff]
        %v1660 = vld [vmem:[%s1657 + $0x10] sm:$0xff]
        %v1661 = vld [vmem:[%s1657 + $0x18] sm:$0xff]
        %v1664 = vrot.slane %v1645, 1
        %v1665 = vrot.slane %v1650, 1
        %v1666 = vsel %vm599, %v1664, %v1665
        %v1667 = vsel %vm1348, %v1666, 0
        %1669 = vmatprep.subr.mxu0 0.0
        %1670 = vmatpush1.msra.mxu0 %v1658
        %1671 = vmatprep.subr.mxu0 0.0
        %1672 = vmatpush1.msra.mxu0 %v1659
        %1673 = vmatprep.subr.mxu0 0.0
        %1674 = vmatpush1.msra.mxu0 %v1660
        %1675 = vmatprep.subr.mxu0 0.0
        %1676 = vmatpush1.msra.mxu0 %v1661
        %1677 = vmatprep.subr.mxu0 0.0
        %1678 = vmatpush1.msra.mxu0 0.0
        %1679 = vmatprep.subr.mxu0 0.0
        %1680 = vmatpush1.msra.mxu0 0.0
        %1681 = vmatprep.subr.mxu0 0.0
        %1682 = vmatpush1.msra.mxu0 0.0
        %1683 = vmatprep.subr.mxu0 0.0
        %1684 = vmatpush1.msra.mxu0 0.0
        %1685 = vmatprep.subr.mxu0 0.0
        %1686 = vmatpush1.msra.mxu0 0.0
        %1687 = vmatprep.subr.mxu0 0.0
        %1688 = vmatpush1.msra.mxu0 0.0
        %1689 = vmatprep.subr.mxu0 0.0
        %1690 = vmatpush1.msra.mxu0 0.0
        %1691 = vmatprep.subr.mxu0 0.0
        %1692 = vmatpush1.msra.mxu0 0.0
        %1693 = vmatprep.subr.mxu0 0.0
        %1694 = vmatpush1.msra.mxu0 0.0
        %1695 = vmatprep.subr.mxu0 0.0
        %1696 = vmatpush1.msra.mxu0 0.0
        %1697 = vmatprep.subr.mxu0 0.0
        %1698 = vmatpush1.msra.mxu0 0.0
        %1699 = vmatprep.subr.mxu0 0.0
        %1700 = vmatpush1.msra.mxu0 0.0
        %1701 = vmatprep.subr.mxu0 0.0
        %1702 = vmatpush1.msra.mxu0 0.0
        %1703 = vmatprep.subr.mxu0 0.0
        %1704 = vmatpush1.msra.mxu0 0.0
        %1705 = vmatprep.subr.mxu0 0.0
        %1706 = vmatpush1.msra.mxu0 0.0
        %1707 = vmatprep.subr.mxu0 0.0
        %1708 = vmatpush1.msra.mxu0 0.0
        %1709 = vmatprep.subr.mxu0 0.0
        %1710 = vmatpush1.msra.mxu0 0.0
        %1711 = vmatprep.subr.mxu0 0.0
        %1712 = vmatpush1.msra.mxu0 0.0
        %1713 = vmatprep.subr.mxu0 0.0
        %1714 = vmatpush1.msra.mxu0 0.0
        %1715 = vmatprep.subr.mxu0 0.0
        %1716 = vmatpush1.msra.mxu0 0.0
        %1717 = vmatprep.subr.mxu0 0.0
        %1718 = vmatpush1.msra.mxu0 0.0
        %1719 = vmatprep.subr.mxu0 0.0
        %1720 = vmatpush1.msra.mxu0 0.0
        %1721 = vmatprep.subr.mxu0 0.0
        %1722 = vmatpush1.msra.mxu0 0.0
        %1723 = vmatprep.subr.mxu0 0.0
        %1724 = vmatpush1.msra.mxu0 0.0
        %1725 = vmatprep.subr.mxu0 0.0
        %1726 = vmatpush1.msra.mxu0 0.0
        %1727 = vmatprep.subr.mxu0 0.0
        %1728 = vmatpush1.msra.mxu0 0.0
        %1729 = vmatprep.subr.mxu0 0.0
        %1730 = vmatpush1.msra.mxu0 0.0
        %1731 = vmatprep.subr.mxu0 0.0
        %1732 = vmatpush1.msra.mxu0 0.0
        %1733 = vmatprep.mubr.f32.mxu0 0.0
        %1734 = vmatmul.mubr.f32.gmra.mrb[0].mxu0 %v1667
        %v1735 = vpop.f32.mrb[0].mxu0
        %v1736 = vadd.f32 0.0, %v1735
        %v1737 = vpop.f32.mrb[0].mxu0
        %1738 = vdwg.mxu0
        %v1739 = vsel %vm1348, %v1645, 0
        %1741 = vmatprep.subr.mxu0 0.0
        %1742 = vmatpush1.msra.mxu0 %v1653
        %1743 = vmatprep.subr.mxu0 0.0
        %1744 = vmatpush1.msra.mxu0 %v1654
        %1745 = vmatprep.subr.mxu0 0.0
        %1746 = vmatpush1.msra.mxu0 %v1655
        %1747 = vmatprep.subr.mxu0 0.0
        %1748 = vmatpush1.msra.mxu0 %v1656
        %1749 = vmatprep.subr.mxu0 0.0
        %1750 = vmatpush1.msra.mxu0 0.0
        %1751 = vmatprep.subr.mxu0 0.0
        %1752 = vmatpush1.msra.mxu0 0.0
        %1753 = vmatprep.subr.mxu0 0.0
        %1754 = vmatpush1.msra.mxu0 0.0
        %1755 = vmatprep.subr.mxu0 0.0
        %1756 = vmatpush1.msra.mxu0 0.0
        %1757 = vmatprep.subr.mxu0 0.0
        %1758 = vmatpush1.msra.mxu0 0.0
        %1759 = vmatprep.subr.mxu0 0.0
        %1760 = vmatpush1.msra.mxu0 0.0
        %1761 = vmatprep.subr.mxu0 0.0
        %1762 = vmatpush1.msra.mxu0 0.0
        %1763 = vmatprep.subr.mxu0 0.0
        %1764 = vmatpush1.msra.mxu0 0.0
        %1765 = vmatprep.subr.mxu0 0.0
        %1766 = vmatpush1.msra.mxu0 0.0
        %1767 = vmatprep.subr.mxu0 0.0
        %1768 = vmatpush1.msra.mxu0 0.0
        %1769 = vmatprep.subr.mxu0 0.0
        %1770 = vmatpush1.msra.mxu0 0.0
        %1771 = vmatprep.subr.mxu0 0.0
        %1772 = vmatpush1.msra.mxu0 0.0
        %1773 = vmatprep.subr.mxu0 0.0
        %1774 = vmatpush1.msra.mxu0 0.0
        %1775 = vmatprep.subr.mxu0 0.0
        %1776 = vmatpush1.msra.mxu0 0.0
        %1777 = vmatprep.subr.mxu0 0.0
        %1778 = vmatpush1.msra.mxu0 0.0
        %1779 = vmatprep.subr.mxu0 0.0
        %1780 = vmatpush1.msra.mxu0 0.0
        %1781 = vmatprep.subr.mxu0 0.0
        %1782 = vmatpush1.msra.mxu0 0.0
        %1783 = vmatprep.subr.mxu0 0.0
        %1784 = vmatpush1.msra.mxu0 0.0
        %1785 = vmatprep.subr.mxu0 0.0
        %1786 = vmatpush1.msra.mxu0 0.0
        %1787 = vmatprep.subr.mxu0 0.0
        %1788 = vmatpush1.msra.mxu0 0.0
        %1789 = vmatprep.subr.mxu0 0.0
        %1790 = vmatpush1.msra.mxu0 0.0
        %1791 = vmatprep.subr.mxu0 0.0
        %1792 = vmatpush1.msra.mxu0 0.0
        %1793 = vmatprep.subr.mxu0 0.0
        %1794 = vmatpush1.msra.mxu0 0.0
        %1795 = vmatprep.subr.mxu0 0.0
        %1796 = vmatpush1.msra.mxu0 0.0
        %1797 = vmatprep.subr.mxu0 0.0
        %1798 = vmatpush1.msra.mxu0 0.0
        %1799 = vmatprep.subr.mxu0 0.0
        %1800 = vmatpush1.msra.mxu0 0.0
        %1801 = vmatprep.subr.mxu0 0.0
        %1802 = vmatpush1.msra.mxu0 0.0
        %1803 = vmatprep.subr.mxu0 0.0
        %1804 = vmatpush1.msra.mxu0 0.0
        %1805 = vmatprep.mubr.f32.mxu0 0.0
        %1806 = vmatmul.mubr.f32.gmra.mrb[0].mxu0 %v1739
        %v1807 = vpop.f32.mrb[0].mxu0
        %v1808 = vadd.f32 %v1736, %v1807
        %v1809 = vpop.f32.mrb[0].mxu0
        %1810 = vdwg.mxu0
        %s1811 = scalar_lea.vmem [#allocation9], 64
        %v1812 = vld [vmem:[%s1811] sm:$0xff]
        %v1813 = vld [vmem:[%s1811 + $0x8] sm:$0xff]
        %v1814 = vld [vmem:[%s1811 + $0x10] sm:$0xff]
        %v1815 = vld [vmem:[%s1811 + $0x18] sm:$0xff]
        %v1816 = vrot.slane %v1645, 2
        %v1817 = vrot.slane %v1650, 2
        %v1818 = vsel %vm773, %v1816, %v1817
        %v1819 = vsel %vm1348, %v1818, 0
        %1821 = vmatprep.subr.mxu0 0.0
        %1822 = vmatpush1.msra.mxu0 %v1812
        %1823 = vmatprep.subr.mxu0 0.0
        %1824 = vmatpush1.msra.mxu0 %v1813
        %1825 = vmatprep.subr.mxu0 0.0
        %1826 = vmatpush1.msra.mxu0 %v1814
        %1827 = vmatprep.subr.mxu0 0.0
        %1828 = vmatpush1.msra.mxu0 %v1815
        %1829 = vmatprep.subr.mxu0 0.0
        %1830 = vmatpush1.msra.mxu0 0.0
        %1831 = vmatprep.subr.mxu0 0.0
        %1832 = vmatpush1.msra.mxu0 0.0
        %1833 = vmatprep.subr.mxu0 0.0
        %1834 = vmatpush1.msra.mxu0 0.0
        %1835 = vmatprep.subr.mxu0 0.0
        %1836 = vmatpush1.msra.mxu0 0.0
        %1837 = vmatprep.subr.mxu0 0.0
        %1838 = vmatpush1.msra.mxu0 0.0
        %1839 = vmatprep.subr.mxu0 0.0
        %1840 = vmatpush1.msra.mxu0 0.0
        %1841 = vmatprep.subr.mxu0 0.0
        %1842 = vmatpush1.msra.mxu0 0.0
        %1843 = vmatprep.subr.mxu0 0.0
        %1844 = vmatpush1.msra.mxu0 0.0
        %1845 = vmatprep.subr.mxu0 0.0
        %1846 = vmatpush1.msra.mxu0 0.0
        %1847 = vmatprep.subr.mxu0 0.0
        %1848 = vmatpush1.msra.mxu0 0.0
        %1849 = vmatprep.subr.mxu0 0.0
        %1850 = vmatpush1.msra.mxu0 0.0
        %1851 = vmatprep.subr.mxu0 0.0
        %1852 = vmatpush1.msra.mxu0 0.0
        %1853 = vmatprep.subr.mxu0 0.0
        %1854 = vmatpush1.msra.mxu0 0.0
        %1855 = vmatprep.subr.mxu0 0.0
        %1856 = vmatpush1.msra.mxu0 0.0
        %1857 = vmatprep.subr.mxu0 0.0
        %1858 = vmatpush1.msra.mxu0 0.0
        %1859 = vmatprep.subr.mxu0 0.0
        %1860 = vmatpush1.msra.mxu0 0.0
        %1861 = vmatprep.subr.mxu0 0.0
        %1862 = vmatpush1.msra.mxu0 0.0
        %1863 = vmatprep.subr.mxu0 0.0
        %1864 = vmatpush1.msra.mxu0 0.0
        %1865 = vmatprep.subr.mxu0 0.0
        %1866 = vmatpush1.msra.mxu0 0.0
        %1867 = vmatprep.subr.mxu0 0.0
        %1868 = vmatpush1.msra.mxu0 0.0
        %1869 = vmatprep.subr.mxu0 0.0
        %1870 = vmatpush1.msra.mxu0 0.0
        %1871 = vmatprep.subr.mxu0 0.0
        %1872 = vmatpush1.msra.mxu0 0.0
        %1873 = vmatprep.subr.mxu0 0.0
        %1874 = vmatpush1.msra.mxu0 0.0
        %1875 = vmatprep.subr.mxu0 0.0
        %1876 = vmatpush1.msra.mxu0 0.0
        %1877 = vmatprep.subr.mxu0 0.0
        %1878 = vmatpush1.msra.mxu0 0.0
        %1879 = vmatprep.subr.mxu0 0.0
        %1880 = vmatpush1.msra.mxu0 0.0
        %1881 = vmatprep.subr.mxu0 0.0
        %1882 = vmatpush1.msra.mxu0 0.0
        %1883 = vmatprep.subr.mxu0 0.0
        %1884 = vmatpush1.msra.mxu0 0.0
        %1885 = vmatprep.mubr.f32.mxu0 0.0
        %1886 = vmatmul.mubr.f32.gmra.mrb[0].mxu0 %v1819
        %v1887 = vpop.f32.mrb[0].mxu0
        %v1888 = vadd.f32 0.0, %v1887
        %v1889 = vpop.f32.mrb[0].mxu0
        %1890 = vdwg.mxu0
        %v1891 = vadd.f32 %v1808, %v1888
        %s1892 = scalar_lea.vmem [#allocation9], 96
        %v1893 = vld [vmem:[%s1892] sm:$0xff]
        %v1894 = vld [vmem:[%s1892 + $0x8] sm:$0xff]
        %v1895 = vld [vmem:[%s1892 + $0x10] sm:$0xff]
        %v1896 = vld [vmem:[%s1892 + $0x18] sm:$0xff]
        %v1897 = vrot.slane %v1645, 3
        %v1898 = vrot.slane %v1650, 3
        %v1899 = vsel %vm869, %v1897, %v1898
        %v1900 = vsel %vm1348, %v1899, 0
        %1902 = vmatprep.subr.mxu0 0.0
        %1903 = vmatpush1.msra.mxu0 %v1893
        %1904 = vmatprep.subr.mxu0 0.0
        %1905 = vmatpush1.msra.mxu0 %v1894
        %1906 = vmatprep.subr.mxu0 0.0
        %1907 = vmatpush1.msra.mxu0 %v1895
        %1908 = vmatprep.subr.mxu0 0.0
        %1909 = vmatpush1.msra.mxu0 %v1896
        %1910 = vmatprep.subr.mxu0 0.0
        %1911 = vmatpush1.msra.mxu0 0.0
        %1912 = vmatprep.subr.mxu0 0.0
        %1913 = vmatpush1.msra.mxu0 0.0
        %1914 = vmatprep.subr.mxu0 0.0
        %1915 = vmatpush1.msra.mxu0 0.0
        %1916 = vmatprep.subr.mxu0 0.0
        %1917 = vmatpush1.msra.mxu0 0.0
        %1918 = vmatprep.subr.mxu0 0.0
        %1919 = vmatpush1.msra.mxu0 0.0
        %1920 = vmatprep.subr.mxu0 0.0
        %1921 = vmatpush1.msra.mxu0 0.0
        %1922 = vmatprep.subr.mxu0 0.0
        %1923 = vmatpush1.msra.mxu0 0.0
        %1924 = vmatprep.subr.mxu0 0.0
        %1925 = vmatpush1.msra.mxu0 0.0
        %1926 = vmatprep.subr.mxu0 0.0
        %1927 = vmatpush1.msra.mxu0 0.0
        %1928 = vmatprep.subr.mxu0 0.0
        %1929 = vmatpush1.msra.mxu0 0.0
        %1930 = vmatprep.subr.mxu0 0.0
        %1931 = vmatpush1.msra.mxu0 0.0
        %1932 = vmatprep.subr.mxu0 0.0
        %1933 = vmatpush1.msra.mxu0 0.0
        %1934 = vmatprep.subr.mxu0 0.0
        %1935 = vmatpush1.msra.mxu0 0.0
        %1936 = vmatprep.subr.mxu0 0.0
        %1937 = vmatpush1.msra.mxu0 0.0
        %1938 = vmatprep.subr.mxu0 0.0
        %1939 = vmatpush1.msra.mxu0 0.0
        %1940 = vmatprep.subr.mxu0 0.0
        %1941 = vmatpush1.msra.mxu0 0.0
        %1942 = vmatprep.subr.mxu0 0.0
        %1943 = vmatpush1.msra.mxu0 0.0
        %1944 = vmatprep.subr.mxu0 0.0
        %1945 = vmatpush1.msra.mxu0 0.0
        %1946 = vmatprep.subr.mxu0 0.0
        %1947 = vmatpush1.msra.mxu0 0.0
        %1948 = vmatprep.subr.mxu0 0.0
        %1949 = vmatpush1.msra.mxu0 0.0
        %1950 = vmatprep.subr.mxu0 0.0
        %1951 = vmatpush1.msra.mxu0 0.0
        %1952 = vmatprep.subr.mxu0 0.0
        %1953 = vmatpush1.msra.mxu0 0.0
        %1954 = vmatprep.subr.mxu0 0.0
        %1955 = vmatpush1.msra.mxu0 0.0
        %1956 = vmatprep.subr.mxu0 0.0
        %1957 = vmatpush1.msra.mxu0 0.0
        %1958 = vmatprep.subr.mxu0 0.0
        %1959 = vmatpush1.msra.mxu0 0.0
        %1960 = vmatprep.subr.mxu0 0.0
        %1961 = vmatpush1.msra.mxu0 0.0
        %1962 = vmatprep.subr.mxu0 0.0
        %1963 = vmatpush1.msra.mxu0 0.0
        %1964 = vmatprep.subr.mxu0 0.0
        %1965 = vmatpush1.msra.mxu0 0.0
        %1966 = vmatprep.mubr.f32.mxu0 0.0
        %1967 = vmatmul.mubr.f32.gmra.mrb[0].mxu0 %v1900
        %v1968 = vpop.f32.mrb[0].mxu0
        %v1969 = vadd.f32 0.0, %v1968
        %v1970 = vpop.f32.mrb[0].mxu0
        %1971 = vdwg.mxu0
        %v1972 = vadd.f32 %v1891, %v1969
        %s1973 = scalar_lea.vmem [#allocation9], 128
        %v1974 = vld [vmem:[%s1973] sm:$0xff]
        %v1975 = vld [vmem:[%s1973 + $0x8] sm:$0xff]
        %v1976 = vld [vmem:[%s1973 + $0x10] sm:$0xff]
        %v1977 = vld [vmem:[%s1973 + $0x18] sm:$0xff]
        %v1978 = vrot.slane %v1645, 4
        %v1979 = vrot.slane %v1650, 4
        %v1980 = vsel %vm965, %v1978, %v1979
        %v1981 = vsel %vm1348, %v1980, 0
        %1983 = vmatprep.subr.mxu0 0.0
        %1984 = vmatpush1.msra.mxu0 %v1974
        %1985 = vmatprep.subr.mxu0 0.0
        %1986 = vmatpush1.msra.mxu0 %v1975
        %1987 = vmatprep.subr.mxu0 0.0
        %1988 = vmatpush1.msra.mxu0 %v1976
        %1989 = vmatprep.subr.mxu0 0.0
        %1990 = vmatpush1.msra.mxu0 %v1977
        %1991 = vmatprep.subr.mxu0 0.0
        %1992 = vmatpush1.msra.mxu0 0.0
        %1993 = vmatprep.subr.mxu0 0.0
        %1994 = vmatpush1.msra.mxu0 0.0
        %1995 = vmatprep.subr.mxu0 0.0
        %1996 = vmatpush1.msra.mxu0 0.0
        %1997 = vmatprep.subr.mxu0 0.0
        %1998 = vmatpush1.msra.mxu0 0.0
        %1999 = vmatprep.subr.mxu0 0.0
        %2000 = vmatpush1.msra.mxu0 0.0
        %2001 = vmatprep.subr.mxu0 0.0
        %2002 = vmatpush1.msra.mxu0 0.0
        %2003 = vmatprep.subr.mxu0 0.0
        %2004 = vmatpush1.msra.mxu0 0.0
        %2005 = vmatprep.subr.mxu0 0.0
        %2006 = vmatpush1.msra.mxu0 0.0
        %2007 = vmatprep.subr.mxu0 0.0
        %2008 = vmatpush1.msra.mxu0 0.0
        %2009 = vmatprep.subr.mxu0 0.0
        %2010 = vmatpush1.msra.mxu0 0.0
        %2011 = vmatprep.subr.mxu0 0.0
        %2012 = vmatpush1.msra.mxu0 0.0
        %2013 = vmatprep.subr.mxu0 0.0
        %2014 = vmatpush1.msra.mxu0 0.0
        %2015 = vmatprep.subr.mxu0 0.0
        %2016 = vmatpush1.msra.mxu0 0.0
        %2017 = vmatprep.subr.mxu0 0.0
        %2018 = vmatpush1.msra.mxu0 0.0
        %2019 = vmatprep.subr.mxu0 0.0
        %2020 = vmatpush1.msra.mxu0 0.0
        %2021 = vmatprep.subr.mxu0 0.0
        %2022 = vmatpush1.msra.mxu0 0.0
        %2023 = vmatprep.subr.mxu0 0.0
        %2024 = vmatpush1.msra.mxu0 0.0
        %2025 = vmatprep.subr.mxu0 0.0
        %2026 = vmatpush1.msra.mxu0 0.0
        %2027 = vmatprep.subr.mxu0 0.0
        %2028 = vmatpush1.msra.mxu0 0.0
        %2029 = vmatprep.subr.mxu0 0.0
        %2030 = vmatpush1.msra.mxu0 0.0
        %2031 = vmatprep.subr.mxu0 0.0
        %2032 = vmatpush1.msra.mxu0 0.0
        %2033 = vmatprep.subr.mxu0 0.0
        %2034 = vmatpush1.msra.mxu0 0.0
        %2035 = vmatprep.subr.mxu0 0.0
        %2036 = vmatpush1.msra.mxu0 0.0
        %2037 = vmatprep.subr.mxu0 0.0
        %2038 = vmatpush1.msra.mxu0 0.0
        %2039 = vmatprep.subr.mxu0 0.0
        %2040 = vmatpush1.msra.mxu0 0.0
        %2041 = vmatprep.subr.mxu0 0.0
        %2042 = vmatpush1.msra.mxu0 0.0
        %2043 = vmatprep.subr.mxu0 0.0
        %2044 = vmatpush1.msra.mxu0 0.0
        %2045 = vmatprep.subr.mxu0 0.0
        %2046 = vmatpush1.msra.mxu0 0.0
        %2047 = vmatprep.mubr.f32.mxu0 0.0
        %2048 = vmatmul.mubr.f32.gmra.mrb[0].mxu0 %v1981
        %v2049 = vpop.f32.mrb[0].mxu0
        %v2050 = vadd.f32 0.0, %v2049
        %v2051 = vpop.f32.mrb[0].mxu0
        %2052 = vdwg.mxu0
        %v2053 = vadd.f32 %v1972, %v2050
        %2054 = vmatprep.subr.mxu0 0.0
        %2055 = vmatpush1.msra.mxu0 %v2053
        %2056 = vmatprep.subr.mxu0 0.0
        %2057 = vmatpush1.msra.mxu0 0.0
        %2058 = vmatprep.subr.mxu0 0.0
        %2059 = vmatpush1.msra.mxu0 0.0
        %2060 = vmatprep.subr.mxu0 0.0
        %2061 = vmatpush1.msra.mxu0 0.0
        %2062 = vmatprep.subr.mxu0 0.0
        %2063 = vmatpush1.msra.mxu0 0.0
        %2064 = vmatprep.subr.mxu0 0.0
        %2065 = vmatpush1.msra.mxu0 0.0
        %2066 = vmatprep.subr.mxu0 0.0
        %2067 = vmatpush1.msra.mxu0 0.0
        %2068 = vmatprep.subr.mxu0 0.0
        %2069 = vmatpush1.msra.mxu0 0.0
        %2070 = vmatprep.subr.mxu0 0.0
        %2071 = vmatpush1.msra.mxu0 0.0
        %2072 = vmatprep.subr.mxu0 0.0
        %2073 = vmatpush1.msra.mxu0 0.0
        %2074 = vmatprep.subr.mxu0 0.0
        %2075 = vmatpush1.msra.mxu0 0.0
        %2076 = vmatprep.subr.mxu0 0.0
        %2077 = vmatpush1.msra.mxu0 0.0
        %2078 = vmatprep.subr.mxu0 0.0
        %2079 = vmatpush1.msra.mxu0 0.0
        %2080 = vmatprep.subr.mxu0 0.0
        %2081 = vmatpush1.msra.mxu0 0.0
        %2082 = vmatprep.subr.mxu0 0.0
        %2083 = vmatpush1.msra.mxu0 0.0
        %2084 = vmatprep.subr.mxu0 0.0
        %2085 = vmatpush1.msra.mxu0 0.0
        %2086 = vmatprep.subr.mxu0 0.0
        %2087 = vmatpush1.msra.mxu0 0.0
        %2088 = vmatprep.subr.mxu0 0.0
        %2089 = vmatpush1.msra.mxu0 0.0
        %2090 = vmatprep.subr.mxu0 0.0
        %2091 = vmatpush1.msra.mxu0 0.0
        %2092 = vmatprep.subr.mxu0 0.0
        %2093 = vmatpush1.msra.mxu0 0.0
        %2094 = vmatprep.subr.mxu0 0.0
        %2095 = vmatpush1.msra.mxu0 0.0
        %2096 = vmatprep.subr.mxu0 0.0
        %2097 = vmatpush1.msra.mxu0 0.0
        %2098 = vmatprep.subr.mxu0 0.0
        %2099 = vmatpush1.msra.mxu0 0.0
        %2100 = vmatprep.subr.mxu0 0.0
        %2101 = vmatpush1.msra.mxu0 0.0
        %2102 = vmatprep.subr.mxu0 0.0
        %2103 = vmatpush1.msra.mxu0 0.0
        %2104 = vmatprep.subr.mxu0 0.0
        %2105 = vmatpush1.msra.mxu0 0.0
        %2106 = vmatprep.subr.mxu0 0.0
        %2107 = vmatpush1.msra.mxu0 0.0
        %2108 = vmatprep.subr.mxu0 0.0
        %2109 = vmatpush1.msra.mxu0 0.0
        %2110 = vmatprep.subr.mxu0 0.0
        %2111 = vmatpush1.msra.mxu0 0.0
        %2112 = vmatprep.subr.mxu0 0.0
        %2113 = vmatpush1.msra.mxu0 0.0
        %2114 = vmatprep.subr.mxu0 0.0
        %2115 = vmatpush1.msra.mxu0 0.0
        %2116 = vmatprep.subr.mxu0 0.0
        %2117 = vmatpush1.msra.mxu0 0.0
        %2118 = vmatprep.mubr.f32.mxu0 0.0
        %2119 = vmatmul.mubr.f32.gmra.mrb[0].mxu0 %v1254
        %v2120 = vpop.f32.mrb[0].mxu0
        %v2121 = vadd.f32 0.0, %v2120
        %v2122 = vpop.f32.mrb[0].mxu0
        %2123 = vmatprep.mubr.f32.mxu0 0.0
        %2124 = vmatmul.mubr.f32.gmra.mrb[0].mxu0 %v1257
        %v2125 = vpop.f32.mrb[0].mxu0
        %v2126 = vadd.f32 0.0, %v2125
        %v2127 = vpop.f32.mrb[0].mxu0
        %2128 = vdwg.mxu0
        %v2129 = vld [vmem:[#allocation10] sm:$0xff]
        %v2130 = vld [vmem:[#allocation10 + $0x8] sm:$0xff]
        %v2131 = vld [vmem:[#allocation10 + $0x10] sm:$0xff]
        %v2132 = vld [vmem:[#allocation10 + $0x18] sm:$0xff]
        %v2134 = vsel %vm1348, %v2121, 0
        %2136 = vmatprep.subr.mxu0 0.0
        %2137 = vmatpush1.msra.mxu0 %v2129
        %2138 = vmatprep.subr.mxu0 0.0
        %2139 = vmatpush1.msra.mxu0 %v2130
        %2140 = vmatprep.subr.mxu0 0.0
        %2141 = vmatpush1.msra.mxu0 %v2131
        %2142 = vmatprep.subr.mxu0 0.0
        %2143 = vmatpush1.msra.mxu0 %v2132
        %2144 = vmatprep.subr.mxu0 0.0
        %2145 = vmatpush1.msra.mxu0 0.0
        %2146 = vmatprep.subr.mxu0 0.0
        %2147 = vmatpush1.msra.mxu0 0.0
        %2148 = vmatprep.subr.mxu0 0.0
        %2149 = vmatpush1.msra.mxu0 0.0
        %2150 = vmatprep.subr.mxu0 0.0
        %2151 = vmatpush1.msra.mxu0 0.0
        %2152 = vmatprep.subr.mxu0 0.0
        %2153 = vmatpush1.msra.mxu0 0.0
        %2154 = vmatprep.subr.mxu0 0.0
        %2155 = vmatpush1.msra.mxu0 0.0
        %2156 = vmatprep.subr.mxu0 0.0
        %2157 = vmatpush1.msra.mxu0 0.0
        %2158 = vmatprep.subr.mxu0 0.0
        %2159 = vmatpush1.msra.mxu0 0.0
        %2160 = vmatprep.subr.mxu0 0.0
        %2161 = vmatpush1.msra.mxu0 0.0
        %2162 = vmatprep.subr.mxu0 0.0
        %2163 = vmatpush1.msra.mxu0 0.0
        %2164 = vmatprep.subr.mxu0 0.0
        %2165 = vmatpush1.msra.mxu0 0.0
        %2166 = vmatprep.subr.mxu0 0.0
        %2167 = vmatpush1.msra.mxu0 0.0
        %2168 = vmatprep.subr.mxu0 0.0
        %2169 = vmatpush1.msra.mxu0 0.0
        %2170 = vmatprep.subr.mxu0 0.0
        %2171 = vmatpush1.msra.mxu0 0.0
        %2172 = vmatprep.subr.mxu0 0.0
        %2173 = vmatpush1.msra.mxu0 0.0
        %2174 = vmatprep.subr.mxu0 0.0
        %2175 = vmatpush1.msra.mxu0 0.0
        %2176 = vmatprep.subr.mxu0 0.0
        %2177 = vmatpush1.msra.mxu0 0.0
        %2178 = vmatprep.subr.mxu0 0.0
        %2179 = vmatpush1.msra.mxu0 0.0
        %2180 = vmatprep.subr.mxu0 0.0
        %2181 = vmatpush1.msra.mxu0 0.0
        %2182 = vmatprep.subr.mxu0 0.0
        %2183 = vmatpush1.msra.mxu0 0.0
        %2184 = vmatprep.subr.mxu0 0.0
        %2185 = vmatpush1.msra.mxu0 0.0
        %2186 = vmatprep.subr.mxu0 0.0
        %2187 = vmatpush1.msra.mxu0 0.0
        %2188 = vmatprep.subr.mxu0 0.0
        %2189 = vmatpush1.msra.mxu0 0.0
        %2190 = vmatprep.subr.mxu0 0.0
        %2191 = vmatpush1.msra.mxu0 0.0
        %2192 = vmatprep.subr.mxu0 0.0
        %2193 = vmatpush1.msra.mxu0 0.0
        %2194 = vmatprep.subr.mxu0 0.0
        %2195 = vmatpush1.msra.mxu0 0.0
        %2196 = vmatprep.subr.mxu0 0.0
        %2197 = vmatpush1.msra.mxu0 0.0
        %2198 = vmatprep.subr.mxu0 0.0
        %2199 = vmatpush1.msra.mxu0 0.0
        %2200 = vmatprep.mubr.f32.mxu0 0.0
        %2201 = vmatmul.mubr.f32.gmra.mrb[0].mxu0 %v2134
        %v2202 = vpop.f32.mrb[0].mxu0
        %v2203 = vadd.f32 0.0, %v2202
        %v2204 = vpop.f32.mrb[0].mxu0
        %2205 = vdwg.mxu0
        %v2206 = vadd.f32 %v1573, %v2203
        %s2207 = scalar_lea.vmem [#allocation10], 32
        %v2208 = vld [vmem:[%s2207] sm:$0xff]
        %v2209 = vld [vmem:[%s2207 + $0x8] sm:$0xff]
        %v2210 = vld [vmem:[%s2207 + $0x10] sm:$0xff]
        %v2211 = vld [vmem:[%s2207 + $0x18] sm:$0xff]
        %v2213 = vrot.slane %v2121, 1
        %v2214 = vrot.slane %v2126, 1
        %v2215 = vsel %vm599, %v2213, %v2214
        %v2216 = vsel %vm1348, %v2215, 0
        %2218 = vmatprep.subr.mxu0 0.0
        %2219 = vmatpush1.msra.mxu0 %v2208
        %2220 = vmatprep.subr.mxu0 0.0
        %2221 = vmatpush1.msra.mxu0 %v2209
        %2222 = vmatprep.subr.mxu0 0.0
        %2223 = vmatpush1.msra.mxu0 %v2210
        %2224 = vmatprep.subr.mxu0 0.0
        %2225 = vmatpush1.msra.mxu0 %v2211
        %2226 = vmatprep.subr.mxu0 0.0
        %2227 = vmatpush1.msra.mxu0 0.0
        %2228 = vmatprep.subr.mxu0 0.0
        %2229 = vmatpush1.msra.mxu0 0.0
        %2230 = vmatprep.subr.mxu0 0.0
        %2231 = vmatpush1.msra.mxu0 0.0
        %2232 = vmatprep.subr.mxu0 0.0
        %2233 = vmatpush1.msra.mxu0 0.0
        %2234 = vmatprep.subr.mxu0 0.0
        %2235 = vmatpush1.msra.mxu0 0.0
        %2236 = vmatprep.subr.mxu0 0.0
        %2237 = vmatpush1.msra.mxu0 0.0
        %2238 = vmatprep.subr.mxu0 0.0
        %2239 = vmatpush1.msra.mxu0 0.0
        %2240 = vmatprep.subr.mxu0 0.0
        %2241 = vmatpush1.msra.mxu0 0.0
        %2242 = vmatprep.subr.mxu0 0.0
        %2243 = vmatpush1.msra.mxu0 0.0
        %2244 = vmatprep.subr.mxu0 0.0
        %2245 = vmatpush1.msra.mxu0 0.0
        %2246 = vmatprep.subr.mxu0 0.0
        %2247 = vmatpush1.msra.mxu0 0.0
        %2248 = vmatprep.subr.mxu0 0.0
        %2249 = vmatpush1.msra.mxu0 0.0
        %2250 = vmatprep.subr.mxu0 0.0
        %2251 = vmatpush1.msra.mxu0 0.0
        %2252 = vmatprep.subr.mxu0 0.0
        %2253 = vmatpush1.msra.mxu0 0.0
        %2254 = vmatprep.subr.mxu0 0.0
        %2255 = vmatpush1.msra.mxu0 0.0
        %2256 = vmatprep.subr.mxu0 0.0
        %2257 = vmatpush1.msra.mxu0 0.0
        %2258 = vmatprep.subr.mxu0 0.0
        %2259 = vmatpush1.msra.mxu0 0.0
        %2260 = vmatprep.subr.mxu0 0.0
        %2261 = vmatpush1.msra.mxu0 0.0
        %2262 = vmatprep.subr.mxu0 0.0
        %2263 = vmatpush1.msra.mxu0 0.0
        %2264 = vmatprep.subr.mxu0 0.0
        %2265 = vmatpush1.msra.mxu0 0.0
        %2266 = vmatprep.subr.mxu0 0.0
        %2267 = vmatpush1.msra.mxu0 0.0
        %2268 = vmatprep.subr.mxu0 0.0
        %2269 = vmatpush1.msra.mxu0 0.0
        %2270 = vmatprep.subr.mxu0 0.0
        %2271 = vmatpush1.msra.mxu0 0.0
        %2272 = vmatprep.subr.mxu0 0.0
        %2273 = vmatpush1.msra.mxu0 0.0
        %2274 = vmatprep.subr.mxu0 0.0
        %2275 = vmatpush1.msra.mxu0 0.0
        %2276 = vmatprep.subr.mxu0 0.0
        %2277 = vmatpush1.msra.mxu0 0.0
        %2278 = vmatprep.subr.mxu0 0.0
        %2279 = vmatpush1.msra.mxu0 0.0
        %2280 = vmatprep.subr.mxu0 0.0
        %2281 = vmatpush1.msra.mxu0 0.0
        %2282 = vmatprep.mubr.f32.mxu0 0.0
        %2283 = vmatmul.mubr.f32.gmra.mrb[0].mxu0 %v2216
        %v2284 = vpop.f32.mrb[0].mxu0
        %v2285 = vadd.f32 0.0, %v2284
        %v2286 = vpop.f32.mrb[0].mxu0
        %2287 = vdwg.mxu0
        %v2288 = vadd.f32 %v2206, %v2285
        %s2289 = scalar_lea.vmem [#allocation10], 64
        %v2290 = vld [vmem:[%s2289] sm:$0xff]
        %v2291 = vld [vmem:[%s2289 + $0x8] sm:$0xff]
        %v2292 = vld [vmem:[%s2289 + $0x10] sm:$0xff]
        %v2293 = vld [vmem:[%s2289 + $0x18] sm:$0xff]
        %v2294 = vrot.slane %v2121, 2
        %v2295 = vrot.slane %v2126, 2
        %v2296 = vsel %vm773, %v2294, %v2295
        %v2297 = vsel %vm1348, %v2296, 0
        %2299 = vmatprep.subr.mxu0 0.0
        %2300 = vmatpush1.msra.mxu0 %v2290
        %2301 = vmatprep.subr.mxu0 0.0
        %2302 = vmatpush1.msra.mxu0 %v2291
        %2303 = vmatprep.subr.mxu0 0.0
        %2304 = vmatpush1.msra.mxu0 %v2292
        %2305 = vmatprep.subr.mxu0 0.0
        %2306 = vmatpush1.msra.mxu0 %v2293
        %2307 = vmatprep.subr.mxu0 0.0
        %2308 = vmatpush1.msra.mxu0 0.0
        %2309 = vmatprep.subr.mxu0 0.0
        %2310 = vmatpush1.msra.mxu0 0.0
        %2311 = vmatprep.subr.mxu0 0.0
        %2312 = vmatpush1.msra.mxu0 0.0
        %2313 = vmatprep.subr.mxu0 0.0
        %2314 = vmatpush1.msra.mxu0 0.0
        %2315 = vmatprep.subr.mxu0 0.0
        %2316 = vmatpush1.msra.mxu0 0.0
        %2317 = vmatprep.subr.mxu0 0.0
        %2318 = vmatpush1.msra.mxu0 0.0
        %2319 = vmatprep.subr.mxu0 0.0
        %2320 = vmatpush1.msra.mxu0 0.0
        %2321 = vmatprep.subr.mxu0 0.0
        %2322 = vmatpush1.msra.mxu0 0.0
        %2323 = vmatprep.subr.mxu0 0.0
        %2324 = vmatpush1.msra.mxu0 0.0
        %2325 = vmatprep.subr.mxu0 0.0
        %2326 = vmatpush1.msra.mxu0 0.0
        %2327 = vmatprep.subr.mxu0 0.0
        %2328 = vmatpush1.msra.mxu0 0.0
        %2329 = vmatprep.subr.mxu0 0.0
        %2330 = vmatpush1.msra.mxu0 0.0
        %2331 = vmatprep.subr.mxu0 0.0
        %2332 = vmatpush1.msra.mxu0 0.0
        %2333 = vmatprep.subr.mxu0 0.0
        %2334 = vmatpush1.msra.mxu0 0.0
        %2335 = vmatprep.subr.mxu0 0.0
        %2336 = vmatpush1.msra.mxu0 0.0
        %2337 = vmatprep.subr.mxu0 0.0
        %2338 = vmatpush1.msra.mxu0 0.0
        %2339 = vmatprep.subr.mxu0 0.0
        %2340 = vmatpush1.msra.mxu0 0.0
        %2341 = vmatprep.subr.mxu0 0.0
        %2342 = vmatpush1.msra.mxu0 0.0
        %2343 = vmatprep.subr.mxu0 0.0
        %2344 = vmatpush1.msra.mxu0 0.0
        %2345 = vmatprep.subr.mxu0 0.0
        %2346 = vmatpush1.msra.mxu0 0.0
        %2347 = vmatprep.subr.mxu0 0.0
        %2348 = vmatpush1.msra.mxu0 0.0
        %2349 = vmatprep.subr.mxu0 0.0
        %2350 = vmatpush1.msra.mxu0 0.0
        %2351 = vmatprep.subr.mxu0 0.0
        %2352 = vmatpush1.msra.mxu0 0.0
        %2353 = vmatprep.subr.mxu0 0.0
        %2354 = vmatpush1.msra.mxu0 0.0
        %2355 = vmatprep.subr.mxu0 0.0
        %2356 = vmatpush1.msra.mxu0 0.0
        %2357 = vmatprep.subr.mxu0 0.0
        %2358 = vmatpush1.msra.mxu0 0.0
        %2359 = vmatprep.subr.mxu0 0.0
        %2360 = vmatpush1.msra.mxu0 0.0
        %2361 = vmatprep.subr.mxu0 0.0
        %2362 = vmatpush1.msra.mxu0 0.0
        %2363 = vmatprep.mubr.f32.mxu0 0.0
        %2364 = vmatmul.mubr.f32.gmra.mrb[0].mxu0 %v2297
        %v2365 = vpop.f32.mrb[0].mxu0
        %v2366 = vadd.f32 0.0, %v2365
        %v2367 = vpop.f32.mrb[0].mxu0
        %2368 = vdwg.mxu0
        %v2369 = vadd.f32 %v2288, %v2366
        %v2370 = vld [vmem:[%s8] sm:$0x1]
        %v2372 = vlaneseq
        %v2373 = vshrl.u32 %v2372, 7
        %v2374 = vsub.s32 0, %v2373
        %v2375 = vrot.slane %v2370, %v2374
        %v2377 = vadd.f32 %v2369, %v2375
        %v2378 = vmax.f32 %v2377, 0.0
        %v2379 = vld [vmem:[%s9] sm:$0xff]
        %v2380 = vld [vmem:[%s9 + $0x8] sm:$0xff]
        %v2381 = vld [vmem:[%s9 + $0x10] sm:$0xff]
        %v2382 = vld [vmem:[%s9 + $0x18] sm:$0xff]
        %v2383 = vld [vmem:[%s9 + $0x20] sm:$0xff]
        %v2384 = vld [vmem:[%s9 + $0x28] sm:$0xff]
        %v2385 = vld [vmem:[%s9 + $0x30] sm:$0xff]
        %v2386 = vld [vmem:[%s9 + $0x38] sm:$0xff]
        %v2387 = vld [vmem:[%s9 + $0x40] sm:$0xff]
        %v2388 = vld [vmem:[%s9 + $0x48] sm:$0xff]
        %v2389 = vld [vmem:[%s9 + $0x50] sm:$0xff]
        %v2390 = vld [vmem:[%s9 + $0x58] sm:$0xff]
        %v2391 = vld [vmem:[%s9 + $0x60] sm:$0xff]
        %v2392 = vld [vmem:[%s9 + $0x68] sm:$0xff]
        %v2393 = vld [vmem:[%s9 + $0x70] sm:$0xff]
        %v2394 = vld [vmem:[%s9 + $0x78] sm:$0xff]
        %v2395 = vld [vmem:[%s10] sm:$0x1]
        %v2397 = vlaneseq
        %v2398 = vshrl.u32 %v2397, 7
        %v2399 = vsub.s32 0, %v2398
        %v2400 = vrot.slane %v2395, %v2399
        %2402 = vmatprep.subr.mxu0 0.0
        %2403 = vmatpush1.msra.mxu0 %v2379
        %2404 = vmatprep.subr.mxu0 0.0
        %2405 = vmatpush1.msra.mxu0 %v2380
        %2406 = vmatprep.subr.mxu0 0.0
        %2407 = vmatpush1.msra.mxu0 %v2381
        %2408 = vmatprep.subr.mxu0 0.0
        %2409 = vmatpush1.msra.mxu0 %v2382
        %2410 = vmatprep.subr.mxu0 0.0
        %2411 = vmatpush1.msra.mxu0 %v2383
        %2412 = vmatprep.subr.mxu0 0.0
        %2413 = vmatpush1.msra.mxu0 %v2384
        %2414 = vmatprep.subr.mxu0 0.0
        %2415 = vmatpush1.msra.mxu0 %v2385
        %2416 = vmatprep.subr.mxu0 0.0
        %2417 = vmatpush1.msra.mxu0 %v2386
        %2418 = vmatprep.subr.mxu0 0.0
        %2419 = vmatpush1.msra.mxu0 %v2387
        %2420 = vmatprep.subr.mxu0 0.0
        %2421 = vmatpush1.msra.mxu0 %v2388
        %2422 = vmatprep.subr.mxu0 0.0
        %2423 = vmatpush1.msra.mxu0 %v2389
        %2424 = vmatprep.subr.mxu0 0.0
        %2425 = vmatpush1.msra.mxu0 %v2390
        %2426 = vmatprep.subr.mxu0 0.0
        %2427 = vmatpush1.msra.mxu0 %v2391
        %2428 = vmatprep.subr.mxu0 0.0
        %2429 = vmatpush1.msra.mxu0 %v2392
        %2430 = vmatprep.subr.mxu0 0.0
        %2431 = vmatpush1.msra.mxu0 %v2393
        %2432 = vmatprep.subr.mxu0 0.0
        %2433 = vmatpush1.msra.mxu0 %v2394
        %2434 = vmatprep.subr.mxu0 0.0
        %2435 = vmatpush1.msra.mxu0 0.0
        %2436 = vmatprep.subr.mxu0 0.0
        %2437 = vmatpush1.msra.mxu0 0.0
        %2438 = vmatprep.subr.mxu0 0.0
        %2439 = vmatpush1.msra.mxu0 0.0
        %2440 = vmatprep.subr.mxu0 0.0
        %2441 = vmatpush1.msra.mxu0 0.0
        %2442 = vmatprep.subr.mxu0 0.0
        %2443 = vmatpush1.msra.mxu0 0.0
        %2444 = vmatprep.subr.mxu0 0.0
        %2445 = vmatpush1.msra.mxu0 0.0
        %2446 = vmatprep.subr.mxu0 0.0
        %2447 = vmatpush1.msra.mxu0 0.0
        %2448 = vmatprep.subr.mxu0 0.0
        %2449 = vmatpush1.msra.mxu0 0.0
        %2450 = vmatprep.subr.mxu0 0.0
        %2451 = vmatpush1.msra.mxu0 0.0
        %2452 = vmatprep.subr.mxu0 0.0
        %2453 = vmatpush1.msra.mxu0 0.0
        %2454 = vmatprep.subr.mxu0 0.0
        %2455 = vmatpush1.msra.mxu0 0.0
        %2456 = vmatprep.subr.mxu0 0.0
        %2457 = vmatpush1.msra.mxu0 0.0
        %2458 = vmatprep.subr.mxu0 0.0
        %2459 = vmatpush1.msra.mxu0 0.0
        %2460 = vmatprep.subr.mxu0 0.0
        %2461 = vmatpush1.msra.mxu0 0.0
        %2462 = vmatprep.subr.mxu0 0.0
        %2463 = vmatpush1.msra.mxu0 0.0
        %2464 = vmatprep.subr.mxu0 0.0
        %2465 = vmatpush1.msra.mxu0 0.0
        %2466 = vmatprep.mubr.f32.mxu0 0.0
        %2467 = vmatmul.mubr.f32.gmra.mrb[0].mxu0 %v2378
        %v2468 = vpop.f32.mrb[0].mxu0
        %v2469 = vadd.f32 %v2400, %v2468
        %v2470 = vpop.f32.mrb[0].mxu0
        %2471 = vdwg.mxu0
        %2472 = vst [vmem:[%s470] sm:$0xff] %v2469
        %p2473 = scmp.lt.s32.totalorder %s26, 1
        %s2474 = scalar_select %p2473, %s26, 1
        %s2475 = smul.addr %s2474, 8
        %s2476 = scalar_lea.vmem %s11, %s2475
        // Predicated region
        $region89: #{_lambda_.1} parent=63 // pred_check
          %p2477 = pneg %p280
        $region90: #{_lambda_.1} parent=63 // pred_check_branch
          %2479 = sbr.rel (%p2477) target = $region92
        $region91: #{_lambda_.1} parent=63 // pred_region
          _
        $region92: #{_lambda_.1} parent=63 // pred_fallthru
          _
      $region64: #{_lambda_.1} parent=5 // pred_fallthru
        _
      %p2480 = scmp.le.s32.totalorder 2, %s21
      // Predicated region
      $region93: #{_lambda_.1} parent=5 // pred_check
        %p2481 = pneg %p2480
      $region94: #{_lambda_.1} parent=5 // pred_check_branch
        %2483 = sbr.rel (%p2481) target = $region96
      $region95: #{_lambda_.1} parent=5 // pred_region
        %s2484 = ssub.s32 %s21, 2
        // Predicated region
        $region97: #{_lambda_.1} parent=95 // pred_check
          %p2485 = pneg %p286
        $region98: #{_lambda_.1} parent=95 // pred_check_branch
          %2487 = sbr.rel (%p2485) target = $region100
        $region99: #{_lambda_.1} parent=95 // pred_region
          %p2488 = scmp.lt.s32.totalorder %s27, 1
          %s2489 = scalar_select %p2488, %s27, 1
          %s2490 = smul.addr %s2489, 8
          %s2491 = scalar_lea.vmem %s11, %s2490
        $region100: #{_lambda_.1} parent=95 // pred_fallthru
          _
      $region96: #{_lambda_.1} parent=5 // pred_fallthru
        _
    $region6: #{_lambda_.1} parent=1 // loop_footer
      %s25 = sadd.s32 1, %s21
    $region7: #{_lambda_.1} parent=1 // loop_footer_branch
      %20 = sbr.rel target = $region3
    $region8: #{_lambda_.1} parent=1 // loop_exit
      _
    %2492 = vsyncpa [#allocation3], 1
    %s2493 = scalar_lea.sflag [#allocation3], 1
    %2494 = vsyncpa %s2493, 1
    %2495 = vsyncpa [#allocation5], 1
    %2496 = vsyncpa [#allocation8], 1
    %2497 = vsyncpa [#allocation11], 1

</llo_original>
